<compile_context>
chip_gen: v7x
topology: tpu7x:2x2x1
jax: 0.10.0
libtpu: 0.0.40
codegen_flags: <defaults>
</compile_context>

<pallas_src>
import functools
import math

import jax
import jax.numpy as jnp
from jax import lax
from jax.experimental import pallas as pl
from jax.experimental.pallas import tpu as pltpu


# ----------------------------- config (small) -----------------------------
VOCAB_SIZE = 128     # multiple of 128 -> lane-dense logits
BLOCK_SIZE = 16
N_LAYER = 2
N_HEAD = 2
N_EMBD = 32
BATCH = 2
SEQ = 8
LN_EPS = 1e-5


# ----------------------------- kernel helpers -----------------------------
def _layer_norm(h, w, b):
    mu = jnp.mean(h, axis=-1, keepdims=True)
    var = jnp.mean((h - mu) ** 2, axis=-1, keepdims=True)
    return (h - mu) * lax.rsqrt(var + LN_EPS) * w + b


def _gelu_tanh(x):
    # GELU(approximate='tanh'), matching PyTorch
    c = 0.7978845608028654  # sqrt(2/pi)
    return 0.5 * x * (1.0 + jnp.tanh(c * (x + 0.044715 * x * x * x)))


# --------------------- fused GPT (all layers + head) kernel -----------------
def gpt_kernel(x_ref, bias_ref,
               ln1w_ref, ln1b_ref, wqkv_ref, bqkv_ref, wproj_ref, bproj_ref,
               ln2w_ref, ln2b_ref, wfc_ref, bfc_ref, wmproj_ref, bmproj_ref,
               lnfw_ref, lnfb_ref, wte_t_ref,
               o_ref, *, n_layer, n_head):
    x = x_ref[...]                        # (N, C) f32 residual stream, N = B*T
    N, C = x.shape
    H = n_head
    D = C // H
    scale = 1.0 / math.sqrt(D)
    attn_bias = bias_ref[...]             # (H*N, H*N) f32, precomputed in glue

    for l in range(n_layer):              # unrolled; all indices static
        # ------------------------- attention -------------------------
        h = _layer_norm(x, ln1w_ref[l], ln1b_ref[l])
        qkv = jnp.dot(h.astype(jnp.bfloat16), wqkv_ref[l],
                      preferred_element_type=jnp.float32) + bqkv_ref[l]      # (N, 3C)

        # Stack heads along the sublane axis -> one score dot, one P@V dot.
        q_stk = jnp.concatenate(
            [qkv[:, hd * D:(hd + 1) * D] for hd in range(H)], axis=0)        # (H*N, D)
        k_stk = jnp.concatenate(
            [qkv[:, C + hd * D:C + (hd + 1) * D] for hd in range(H)], axis=0)
        v_stk = jnp.concatenate(
            [qkv[:, 2 * C + hd * D:2 * C + (hd + 1) * D] for hd in range(H)], axis=0)

        s = lax.dot_general(q_stk.astype(jnp.bfloat16), k_stk.astype(jnp.bfloat16),
                            (((1,), (1,)), ((), ())),
                            preferred_element_type=jnp.float32) * scale      # (H*N, H*N)
        s = s + attn_bias                 # block-diag over head & batch, causal
        s = s - jnp.max(s, axis=-1, keepdims=True)
        p = jnp.exp(s)
        p = p * pl.reciprocal(jnp.sum(p, axis=-1, keepdims=True), approx=True)
        attn = jnp.dot(p.astype(jnp.bfloat16), v_stk.astype(jnp.bfloat16),
                       preferred_element_type=jnp.float32)                   # (H*N, D)

        # Per-head output projection accumulated straight into the residual
        # (no lane-concat of heads; MXU accumulation instead).
        y = x
        for hd in range(H):
            y = y + jnp.dot(attn[hd * N:(hd + 1) * N].astype(jnp.bfloat16),
                            wproj_ref[l * H + hd],
                            preferred_element_type=jnp.float32)
        x = y + bproj_ref[l]

        # ---------------------------- MLP ----------------------------
        h2 = _layer_norm(x, ln2w_ref[l], ln2b_ref[l])
        h2 = jnp.dot(h2.astype(jnp.bfloat16), wfc_ref[l],
                     preferred_element_type=jnp.float32) + bfc_ref[l]
        h2 = _gelu_tanh(h2)
        h2 = jnp.dot(h2.astype(jnp.bfloat16), wmproj_ref[l],
                     preferred_element_type=jnp.float32) + bmproj_ref[l]
        x = x + h2

    # -------------------- final LN + tied lm_head --------------------
    hf = _layer_norm(x, lnfw_ref[...], lnfb_ref[...])
    o_ref[...] = jnp.dot(hf.astype(jnp.bfloat16), wte_t_ref[...],
                         preferred_element_type=jnp.float32)                 # (N, V)
    # TODO(synk): at real GPT size (C=768, V=50304, L=12) the stacked weights
    # do not fit VMEM (esp. v7x's 64 MiB): turn the layer loop into an
    # 'arbitrary' grid axis with per-layer weight BlockSpecs and the activation
    # carried in VMEM scratch, split the lm_head into its own pallas_call tiled
    # over V (TILE_V multiple of 128) emitting bf16 logits, and raise
    # vmem_limit_bytes explicitly.


# ------------------------------- GPT forward -------------------------------
@functools.partial(jax.jit, static_argnames=("n_layer", "n_head"))
def gpt_forward(idx, fused, n_layer, n_head):
    B, T = idx.shape
    V, C = fused["wte"].shape
    N = B * T
    H = n_head

    # embedding gathers (plain JAX glue under jit); batch folded to (N, C)
    tok = jnp.take(fused["wte"], idx.reshape(-1), axis=0)      # (N, C)
    pos = jnp.tile(fused["wpe"][:T], (B, 1))                   # (N, C)
    x = (tok + pos).astype(jnp.float32)

    # Precomputed additive mask (constant-folded by XLA): causal within a
    # sequence, block-diagonal over batch and over head (heads are stacked
    # along sublanes inside the kernel). Finite -1e30, no inf/NaN hazards.
    m = jnp.arange(H * N)
    head = m // N
    tokn = m % N
    batch = tokn // T
    t = tokn % T
    valid = ((head[:, None] == head[None, :])
             & (batch[:, None] == batch[None, :])
             & (t[None, :] <= t[:, None]))
    attn_bias = jnp.where(valid, 0.0, -1e30).astype(jnp.float32)

    param_keys = ["ln1_w", "ln1_b", "w_qkv", "b_qkv", "w_proj", "b_proj",
                  "ln2_w", "ln2_b", "w_fc", "b_fc", "w_mproj", "b_mproj",
                  "ln_f_w", "ln_f_b", "wte_t"]
    p_args = [fused[k] for k in param_keys]

    # No grid: the whole (tiny) problem is one kernel invocation, every input
    # is resident in VMEM exactly once (no double-buffering of constants).
    vmem = pl.BlockSpec(memory_space=pltpu.MemorySpace.VMEM)
    logits = pl.pallas_call(
        functools.partial(gpt_kernel, n_layer=n_layer, n_head=n_head),
        out_shape=jax.ShapeDtypeStruct((N, V), jnp.float32),
        in_specs=[vmem] * (2 + len(p_args)),
        out_specs=vmem,
    )(x, attn_bias, *p_args)
    return logits.reshape(B, T, V)   # loss=None path (no targets)
    # TODO(synk): cross_entropy loss branch (targets is not None) not implemented.


# ----------------------------- parameter init ------------------------------
def init_params(key, vocab_size, block_size, n_layer, n_head, n_embd):
    std = 0.02
    scaled_std = 0.02 * (2 * n_layer) ** -0.5  # NANOGPT_SCALE_INIT projections
    keys = iter(jax.random.split(key, 4 + 4 * n_layer))

    params = {
        'wte': jax.random.normal(next(keys), (vocab_size, n_embd), jnp.float32) * std,
        'wpe': jax.random.normal(next(keys), (block_size, n_embd), jnp.float32) * std,
        'ln_f_w': jnp.ones((1, n_embd), jnp.float32),
        'ln_f_b': jnp.zeros((1, n_embd), jnp.float32),
        'blocks': [],
    }
    for _ in range(n_layer):
        blk = {
            'ln1_w': jnp.ones((1, n_embd), jnp.float32),
            'ln1_b': jnp.zeros((1, n_embd), jnp.float32),
            # pre-transposed Linear weights: (in, out)
            'w_qkv': jax.random.normal(next(keys), (n_embd, 3 * n_embd), jnp.float32) * std,
            'b_qkv': jnp.zeros((1, 3 * n_embd), jnp.float32),
            'w_proj': jax.random.normal(next(keys), (n_embd, n_embd), jnp.float32) * scaled_std,
            'b_proj': jnp.zeros((1, n_embd), jnp.float32),
            'ln2_w': jnp.ones((1, n_embd), jnp.float32),
            'ln2_b': jnp.zeros((1, n_embd), jnp.float32),
            'w_fc': jax.random.normal(next(keys), (n_embd, 4 * n_embd), jnp.float32) * std,
            'b_fc': jnp.zeros((1, 4 * n_embd), jnp.float32),
            'w_mproj': jax.random.normal(next(keys), (4 * n_embd, n_embd), jnp.float32) * scaled_std,
            'b_mproj': jnp.zeros((1, n_embd), jnp.float32),
        }
        params['blocks'].append(blk)
    return params


def prepare_fused_params(params, n_head):
    """Stack per-layer params on a leading layer axis, pre-cast matmul weights
    to bf16 (f32 accumulation stays in-kernel), pre-slice w_proj per head and
    pre-transpose the tied wte."""
    blks = params['blocks']
    C = params['wte'].shape[1]
    D = C // n_head

    def stack(k, dtype=None):
        a = jnp.stack([b[k] for b in blks], axis=0)
        return a.astype(dtype) if dtype is not None else a

    # w_proj rows are head-major input features; pre-slice to (L*H, D, C) so
    # the kernel accumulates y += head_h @ w_proj[l*H+h] (no lane-concat).
    w_proj = jnp.concatenate(
        [b['w_proj'].reshape(n_head, D, C) for b in blks], axis=0)

    return {
        'ln1_w':   stack('ln1_w'),                         # (L, 1, C)    f32
        'ln1_b':   stack('ln1_b'),
        'w_qkv':   stack('w_qkv', jnp.bfloat16),           # (L, C, 3C)   bf16
        'b_qkv':   stack('b_qkv'),                         # (L, 1, 3C)   f32
        'w_proj':  w_proj.astype(jnp.bfloat16),            # (L*H, D, C)  bf16
        'b_proj':  stack('b_proj'),
        'ln2_w':   stack('ln2_w'),
        'ln2_b':   stack('ln2_b'),
        'w_fc':    stack('w_fc', jnp.bfloat16),             # (L, C, 4C)
        'b_fc':    stack('b_fc'),
        'w_mproj': stack('w_mproj', jnp.bfloat16),           # (L, 4C, C)
        'b_mproj': stack('b_mproj'),
        'ln_f_w':  params['ln_f_w'],                        # (1, C)
        'ln_f_b':  params['ln_f_b'],
        'wte':     params['wte'],                           # (V, C) f32 for gather
        'wpe':     params['wpe'],                           # (block_size, C)
        'wte_t':   params['wte'].T.astype(jnp.bfloat16),    # (C, V) tied head
    }


# ----------------------------------- main -----------------------------------
if __name__ == "__main__":
    key = jax.random.PRNGKey(0)
    pkey, ikey = jax.random.split(key)

    params = init_params(pkey, VOCAB_SIZE, BLOCK_SIZE, N_LAYER, N_HEAD, N_EMBD)
    fused = prepare_fused_params(params, N_HEAD)
    idx = jax.random.randint(ikey, (BATCH, SEQ), 0, VOCAB_SIZE, dtype=jnp.int32)

    logits = gpt_forward(idx, fused, N_LAYER, N_HEAD)
    jax.block_until_ready(logits)

    assert logits.shape == (BATCH, SEQ, VOCAB_SIZE)
    assert logits.dtype == jnp.float32
    assert bool(jnp.all(jnp.isfinite(logits)))
    print("KERNEL_OK")
</pallas_src>

<mosaic_0001>
module attributes {stable_mosaic.version = 11 : i64} {
  func.func @gpt_kernel(%arg0: memref<16x32xf32, #tpu.memory_space<vmem>>, %arg1: memref<32x32xf32, #tpu.memory_space<vmem>>, %arg2: memref<2x1x32xf32, #tpu.memory_space<vmem>>, %arg3: memref<2x1x32xf32, #tpu.memory_space<vmem>>, %arg4: memref<2x32x96xbf16, #tpu.memory_space<vmem>>, %arg5: memref<2x1x96xf32, #tpu.memory_space<vmem>>, %arg6: memref<4x16x32xbf16, #tpu.memory_space<vmem>>, %arg7: memref<2x1x32xf32, #tpu.memory_space<vmem>>, %arg8: memref<2x1x32xf32, #tpu.memory_space<vmem>>, %arg9: memref<2x1x32xf32, #tpu.memory_space<vmem>>, %arg10: memref<2x32x128xbf16, #tpu.memory_space<vmem>>, %arg11: memref<2x1x128xf32, #tpu.memory_space<vmem>>, %arg12: memref<2x128x32xbf16, #tpu.memory_space<vmem>>, %arg13: memref<2x1x32xf32, #tpu.memory_space<vmem>>, %arg14: memref<1x32xf32, #tpu.memory_space<vmem>>, %arg15: memref<1x32xf32, #tpu.memory_space<vmem>>, %arg16: memref<32x128xbf16, #tpu.memory_space<vmem>>, %arg17: memref<16x128xf32, #tpu.memory_space<vmem>>) attributes {dimension_semantics = [], scalar_prefetch = 0 : i64, scratch_operands = 0 : i64, tpu.core_type = #tpu.core_type<tc>} {
    %c0 = arith.constant 0 : index
    %c0_0 = arith.constant 0 : index
    %0 = vector.load %arg0[%c0, %c0_0] : memref<16x32xf32, #tpu.memory_space<vmem>>, vector<16x32xf32>
    %c0_1 = arith.constant 0 : index
    %c0_2 = arith.constant 0 : index
    %1 = vector.load %arg1[%c0_1, %c0_2] : memref<32x32xf32, #tpu.memory_space<vmem>>, vector<32x32xf32>
    %c0_3 = arith.constant 0 : index
    %c0_4 = arith.constant 0 : index
    %c0_5 = arith.constant 0 : index
    %2 = vector.load %arg2[%c0_3, %c0_4, %c0_5] : memref<2x1x32xf32, #tpu.memory_space<vmem>>, vector<1x1x32xf32>
    %3 = vector.shape_cast %2 : vector<1x1x32xf32> to vector<1x32xf32>
    %c0_6 = arith.constant 0 : index
    %c0_7 = arith.constant 0 : index
    %c0_8 = arith.constant 0 : index
    %4 = vector.load %arg3[%c0_6, %c0_7, %c0_8] : memref<2x1x32xf32, #tpu.memory_space<vmem>>, vector<1x1x32xf32>
    %5 = vector.shape_cast %4 : vector<1x1x32xf32> to vector<1x32xf32>
    %cst = arith.constant dense<0.000000e+00> : vector<16xf32>
    %6 = vector.multi_reduction <add>, %0, %cst [1] : vector<16x32xf32> to vector<16xf32>
    %7 = vector.shape_cast %6 : vector<16xf32> to vector<16x1xf32>
    %cst_9 = arith.constant 3.200000e+01 : f32
    %8 = vector.broadcast %cst_9 : f32 to vector<16x1xf32>
    %9 = arith.divf %7, %8 : vector<16x1xf32>
    %10 = vector.broadcast %9 : vector<16x1xf32> to vector<16x32xf32>
    %11 = arith.subf %0, %10 : vector<16x32xf32>
    %12 = arith.mulf %11, %11 : vector<16x32xf32>
    %cst_10 = arith.constant dense<0.000000e+00> : vector<16xf32>
    %13 = vector.multi_reduction <add>, %12, %cst_10 [1] : vector<16x32xf32> to vector<16xf32>
    %14 = vector.shape_cast %13 : vector<16xf32> to vector<16x1xf32>
    %cst_11 = arith.constant 3.200000e+01 : f32
    %15 = vector.broadcast %cst_11 : f32 to vector<16x1xf32>
    %16 = arith.divf %14, %15 : vector<16x1xf32>
    %17 = vector.broadcast %9 : vector<16x1xf32> to vector<16x32xf32>
    %18 = arith.subf %0, %17 : vector<16x32xf32>
    %cst_12 = arith.constant 9.99999974E-6 : f32
    %19 = vector.broadcast %cst_12 : f32 to vector<16x1xf32>
    %20 = arith.addf %16, %19 : vector<16x1xf32>
    %21 = math.rsqrt %20 : vector<16x1xf32>
    %22 = vector.broadcast %21 : vector<16x1xf32> to vector<16x32xf32>
    %23 = arith.mulf %18, %22 : vector<16x32xf32>
    %24 = vector.broadcast %3 : vector<1x32xf32> to vector<16x32xf32>
    %25 = arith.mulf %23, %24 : vector<16x32xf32>
    %26 = vector.broadcast %5 : vector<1x32xf32> to vector<16x32xf32>
    %27 = arith.addf %25, %26 : vector<16x32xf32>
    %28 = arith.truncf %27 : vector<16x32xf32> to vector<16x32xbf16>
    %c0_13 = arith.constant 0 : index
    %c0_14 = arith.constant 0 : index
    %c0_15 = arith.constant 0 : index
    %29 = vector.load %arg4[%c0_13, %c0_14, %c0_15] : memref<2x32x96xbf16, #tpu.memory_space<vmem>>, vector<1x32x96xbf16>
    %30 = vector.shape_cast %29 : vector<1x32x96xbf16> to vector<32x96xbf16>
    %cst_16 = arith.constant dense<0.000000e+00> : vector<16x96xf32>
    %31 = tpu.matmul %28, %30, %cst_16 {dimension_numbers = #tpu.dot_dimension_numbers<[1], [0], [0], [1], [0, 0, 1, 1], [], []>} : vector<16x32xbf16>, vector<32x96xbf16>, vector<16x96xf32> -> vector<16x96xf32>
    %c0_17 = arith.constant 0 : index
    %c0_18 = arith.constant 0 : index
    %c0_19 = arith.constant 0 : index
    %32 = vector.load %arg5[%c0_17, %c0_18, %c0_19] : memref<2x1x96xf32, #tpu.memory_space<vmem>>, vector<1x1x96xf32>
    %33 = vector.shape_cast %32 : vector<1x1x96xf32> to vector<1x96xf32>
    %34 = vector.broadcast %33 : vector<1x96xf32> to vector<16x96xf32>
    %35 = arith.addf %31, %34 : vector<16x96xf32>
    %36 = vector.extract_strided_slice %35 {offsets = [0, 0], sizes = [16, 16], strides = [1, 1]} : vector<16x96xf32> to vector<16x16xf32>
    %37 = vector.extract_strided_slice %35 {offsets = [0, 16], sizes = [16, 16], strides = [1, 1]} : vector<16x96xf32> to vector<16x16xf32>
    %38 = tpu.concatenate %36, %37 in 0 : vector<16x16xf32>, vector<16x16xf32> -> vector<32x16xf32>
    %39 = vector.extract_strided_slice %35 {offsets = [0, 32], sizes = [16, 16], strides = [1, 1]} : vector<16x96xf32> to vector<16x16xf32>
    %40 = vector.extract_strided_slice %35 {offsets = [0, 48], sizes = [16, 16], strides = [1, 1]} : vector<16x96xf32> to vector<16x16xf32>
    %41 = tpu.concatenate %39, %40 in 0 : vector<16x16xf32>, vector<16x16xf32> -> vector<32x16xf32>
    %42 = vector.extract_strided_slice %35 {offsets = [0, 64], sizes = [16, 16], strides = [1, 1]} : vector<16x96xf32> to vector<16x16xf32>
    %43 = vector.extract_strided_slice %35 {offsets = [0, 80], sizes = [16, 16], strides = [1, 1]} : vector<16x96xf32> to vector<16x16xf32>
    %44 = tpu.concatenate %42, %43 in 0 : vector<16x16xf32>, vector<16x16xf32> -> vector<32x16xf32>
    %45 = arith.truncf %38 : vector<32x16xf32> to vector<32x16xbf16>
    %46 = arith.truncf %41 : vector<32x16xf32> to vector<32x16xbf16>
    %cst_20 = arith.constant dense<0.000000e+00> : vector<32x32xf32>
    %47 = tpu.matmul %45, %46, %cst_20 {dimension_numbers = #tpu.dot_dimension_numbers<[1], [1], [0], [0], [0, 0, 1, 0], [], []>} : vector<32x16xbf16>, vector<32x16xbf16>, vector<32x32xf32> -> vector<32x32xf32>
    %cst_21 = arith.constant 2.500000e-01 : f32
    %48 = vector.broadcast %cst_21 : f32 to vector<32x32xf32>
    %49 = arith.mulf %47, %48 : vector<32x32xf32>
    %50 = arith.addf %49, %1 : vector<32x32xf32>
    %cst_22 = arith.constant dense<0xFF800000> : vector<32xf32>
    %51 = vector.multi_reduction <maximumf>, %50, %cst_22 [1] : vector<32x32xf32> to vector<32xf32>
    %52 = vector.shape_cast %51 : vector<32xf32> to vector<32x1xf32>
    %53 = vector.broadcast %52 : vector<32x1xf32> to vector<32x32xf32>
    %54 = arith.subf %50, %53 : vector<32x32xf32>
    %55 = math.exp %54 : vector<32x32xf32>
    %cst_23 = arith.constant dense<0.000000e+00> : vector<32xf32>
    %56 = vector.multi_reduction <add>, %55, %cst_23 [1] : vector<32x32xf32> to vector<32xf32>
    %57 = vector.shape_cast %56 : vector<32xf32> to vector<32x1xf32>
    %58 = tpu.reciprocal %57 {approx = true} : vector<32x1xf32> -> vector<32x1xf32>
    %59 = vector.broadcast %58 : vector<32x1xf32> to vector<32x32xf32>
    %60 = arith.mulf %55, %59 : vector<32x32xf32>
    %61 = arith.truncf %60 : vector<32x32xf32> to vector<32x32xbf16>
    %62 = arith.truncf %44 : vector<32x16xf32> to vector<32x16xbf16>
    %cst_24 = arith.constant dense<0.000000e+00> : vector<32x16xf32>
    %63 = tpu.matmul %61, %62, %cst_24 {dimension_numbers = #tpu.dot_dimension_numbers<[1], [0], [0], [1], [0, 0, 1, 1], [], []>} : vector<32x32xbf16>, vector<32x16xbf16>, vector<32x16xf32> -> vector<32x16xf32>
    %64 = vector.extract_strided_slice %63 {offsets = [0, 0], sizes = [16, 16], strides = [1, 1]} : vector<32x16xf32> to vector<16x16xf32>
    %65 = arith.truncf %64 : vector<16x16xf32> to vector<16x16xbf16>
    %c0_25 = arith.constant 0 : index
    %c0_26 = arith.constant 0 : index
    %c0_27 = arith.constant 0 : index
    %66 = vector.load %arg6[%c0_25, %c0_26, %c0_27] : memref<4x16x32xbf16, #tpu.memory_space<vmem>>, vector<1x16x32xbf16>
    %67 = vector.shape_cast %66 : vector<1x16x32xbf16> to vector<16x32xbf16>
    %cst_28 = arith.constant dense<0.000000e+00> : vector<16x32xf32>
    %68 = tpu.matmul %65, %67, %cst_28 {dimension_numbers = #tpu.dot_dimension_numbers<[1], [0], [0], [1], [0, 0, 1, 1], [], []>} : vector<16x16xbf16>, vector<16x32xbf16>, vector<16x32xf32> -> vector<16x32xf32>
    %69 = arith.addf %0, %68 : vector<16x32xf32>
    %70 = vector.extract_strided_slice %63 {offsets = [16, 0], sizes = [16, 16], strides = [1, 1]} : vector<32x16xf32> to vector<16x16xf32>
    %71 = arith.truncf %70 : vector<16x16xf32> to vector<16x16xbf16>
    %c1 = arith.constant 1 : index
    %c0_29 = arith.constant 0 : index
    %c0_30 = arith.constant 0 : index
    %72 = vector.load %arg6[%c1, %c0_29, %c0_30] : memref<4x16x32xbf16, #tpu.memory_space<vmem>>, vector<1x16x32xbf16>
    %73 = vector.shape_cast %72 : vector<1x16x32xbf16> to vector<16x32xbf16>
    %cst_31 = arith.constant dense<0.000000e+00> : vector<16x32xf32>
    %74 = tpu.matmul %71, %73, %cst_31 {dimension_numbers = #tpu.dot_dimension_numbers<[1], [0], [0], [1], [0, 0, 1, 1], [], []>} : vector<16x16xbf16>, vector<16x32xbf16>, vector<16x32xf32> -> vector<16x32xf32>
    %75 = arith.addf %69, %74 : vector<16x32xf32>
    %c0_32 = arith.constant 0 : index
    %c0_33 = arith.constant 0 : index
    %c0_34 = arith.constant 0 : index
    %76 = vector.load %arg7[%c0_32, %c0_33, %c0_34] : memref<2x1x32xf32, #tpu.memory_space<vmem>>, vector<1x1x32xf32>
    %77 = vector.shape_cast %76 : vector<1x1x32xf32> to vector<1x32xf32>
    %78 = vector.broadcast %77 : vector<1x32xf32> to vector<16x32xf32>
    %79 = arith.addf %75, %78 : vector<16x32xf32>
    %c0_35 = arith.constant 0 : index
    %c0_36 = arith.constant 0 : index
    %c0_37 = arith.constant 0 : index
    %80 = vector.load %arg8[%c0_35, %c0_36, %c0_37] : memref<2x1x32xf32, #tpu.memory_space<vmem>>, vector<1x1x32xf32>
    %81 = vector.shape_cast %80 : vector<1x1x32xf32> to vector<1x32xf32>
    %c0_38 = arith.constant 0 : index
    %c0_39 = arith.constant 0 : index
    %c0_40 = arith.constant 0 : index
    %82 = vector.load %arg9[%c0_38, %c0_39, %c0_40] : memref<2x1x32xf32, #tpu.memory_space<vmem>>, vector<1x1x32xf32>
    %83 = vector.shape_cast %82 : vector<1x1x32xf32> to vector<1x32xf32>
    %cst_41 = arith.constant dense<0.000000e+00> : vector<16xf32>
    %84 = vector.multi_reduction <add>, %79, %cst_41 [1] : vector<16x32xf32> to vector<16xf32>
    %85 = vector.shape_cast %84 : vector<16xf32> to vector<16x1xf32>
    %cst_42 = arith.constant 3.200000e+01 : f32
    %86 = vector.broadcast %cst_42 : f32 to vector<16x1xf32>
    %87 = arith.divf %85, %86 : vector<16x1xf32>
    %88 = vector.broadcast %87 : vector<16x1xf32> to vector<16x32xf32>
    %89 = arith.subf %79, %88 : vector<16x32xf32>
    %90 = arith.mulf %89, %89 : vector<16x32xf32>
    %cst_43 = arith.constant dense<0.000000e+00> : vector<16xf32>
    %91 = vector.multi_reduction <add>, %90, %cst_43 [1] : vector<16x32xf32> to vector<16xf32>
    %92 = vector.shape_cast %91 : vector<16xf32> to vector<16x1xf32>
    %cst_44 = arith.constant 3.200000e+01 : f32
    %93 = vector.broadcast %cst_44 : f32 to vector<16x1xf32>
    %94 = arith.divf %92, %93 : vector<16x1xf32>
    %95 = vector.broadcast %87 : vector<16x1xf32> to vector<16x32xf32>
    %96 = arith.subf %79, %95 : vector<16x32xf32>
    %cst_45 = arith.constant 9.99999974E-6 : f32
    %97 = vector.broadcast %cst_45 : f32 to vector<16x1xf32>
    %98 = arith.addf %94, %97 : vector<16x1xf32>
    %99 = math.rsqrt %98 : vector<16x1xf32>
    %100 = vector.broadcast %99 : vector<16x1xf32> to vector<16x32xf32>
    %101 = arith.mulf %96, %100 : vector<16x32xf32>
    %102 = vector.broadcast %81 : vector<1x32xf32> to vector<16x32xf32>
    %103 = arith.mulf %101, %102 : vector<16x32xf32>
    %104 = vector.broadcast %83 : vector<1x32xf32> to vector<16x32xf32>
    %105 = arith.addf %103, %104 : vector<16x32xf32>
    %106 = arith.truncf %105 : vector<16x32xf32> to vector<16x32xbf16>
    %c0_46 = arith.constant 0 : index
    %c0_47 = arith.constant 0 : index
    %c0_48 = arith.constant 0 : index
    %107 = vector.load %arg10[%c0_46, %c0_47, %c0_48] : memref<2x32x128xbf16, #tpu.memory_space<vmem>>, vector<1x32x128xbf16>
    %108 = vector.shape_cast %107 : vector<1x32x128xbf16> to vector<32x128xbf16>
    %cst_49 = arith.constant dense<0.000000e+00> : vector<16x128xf32>
    %109 = tpu.matmul %106, %108, %cst_49 {dimension_numbers = #tpu.dot_dimension_numbers<[1], [0], [0], [1], [0, 0, 1, 1], [], []>} : vector<16x32xbf16>, vector<32x128xbf16>, vector<16x128xf32> -> vector<16x128xf32>
    %c0_50 = arith.constant 0 : index
    %c0_51 = arith.constant 0 : index
    %c0_52 = arith.constant 0 : index
    %110 = vector.load %arg11[%c0_50, %c0_51, %c0_52] : memref<2x1x128xf32, #tpu.memory_space<vmem>>, vector<1x1x128xf32>
    %111 = vector.shape_cast %110 : vector<1x1x128xf32> to vector<1x128xf32>
    %112 = vector.broadcast %111 : vector<1x128xf32> to vector<16x128xf32>
    %113 = arith.addf %109, %112 : vector<16x128xf32>
    %cst_53 = arith.constant 5.000000e-01 : f32
    %114 = vector.broadcast %cst_53 : f32 to vector<16x128xf32>
    %115 = arith.mulf %114, %113 : vector<16x128xf32>
    %cst_54 = arith.constant 4.471500e-02 : f32
    %116 = vector.broadcast %cst_54 : f32 to vector<16x128xf32>
    %117 = arith.mulf %116, %113 : vector<16x128xf32>
    %118 = arith.mulf %117, %113 : vector<16x128xf32>
    %119 = arith.mulf %118, %113 : vector<16x128xf32>
    %120 = arith.addf %113, %119 : vector<16x128xf32>
    %cst_55 = arith.constant 0.797884583 : f32
    %121 = vector.broadcast %cst_55 : f32 to vector<16x128xf32>
    %122 = arith.mulf %121, %120 : vector<16x128xf32>
    %123 = math.tanh %122 : vector<16x128xf32>
    %cst_56 = arith.constant 1.000000e+00 : f32
    %124 = vector.broadcast %cst_56 : f32 to vector<16x128xf32>
    %125 = arith.addf %124, %123 : vector<16x128xf32>
    %126 = arith.mulf %115, %125 : vector<16x128xf32>
    %127 = arith.truncf %126 : vector<16x128xf32> to vector<16x128xbf16>
    %c0_57 = arith.constant 0 : index
    %c0_58 = arith.constant 0 : index
    %c0_59 = arith.constant 0 : index
    %128 = vector.load %arg12[%c0_57, %c0_58, %c0_59] : memref<2x128x32xbf16, #tpu.memory_space<vmem>>, vector<1x128x32xbf16>
    %129 = vector.shape_cast %128 : vector<1x128x32xbf16> to vector<128x32xbf16>
    %cst_60 = arith.constant dense<0.000000e+00> : vector<16x32xf32>
    %130 = tpu.matmul %127, %129, %cst_60 {dimension_numbers = #tpu.dot_dimension_numbers<[1], [0], [0], [1], [0, 0, 1, 1], [], []>} : vector<16x128xbf16>, vector<128x32xbf16>, vector<16x32xf32> -> vector<16x32xf32>
    %c0_61 = arith.constant 0 : index
    %c0_62 = arith.constant 0 : index
    %c0_63 = arith.constant 0 : index
    %131 = vector.load %arg13[%c0_61, %c0_62, %c0_63] : memref<2x1x32xf32, #tpu.memory_space<vmem>>, vector<1x1x32xf32>
    %132 = vector.shape_cast %131 : vector<1x1x32xf32> to vector<1x32xf32>
    %133 = vector.broadcast %132 : vector<1x32xf32> to vector<16x32xf32>
    %134 = arith.addf %130, %133 : vector<16x32xf32>
    %135 = arith.addf %79, %134 : vector<16x32xf32>
    %c1_64 = arith.constant 1 : index
    %c0_65 = arith.constant 0 : index
    %c0_66 = arith.constant 0 : index
    %136 = vector.load %arg2[%c1_64, %c0_65, %c0_66] : memref<2x1x32xf32, #tpu.memory_space<vmem>>, vector<1x1x32xf32>
    %137 = vector.shape_cast %136 : vector<1x1x32xf32> to vector<1x32xf32>
    %c1_67 = arith.constant 1 : index
    %c0_68 = arith.constant 0 : index
    %c0_69 = arith.constant 0 : index
    %138 = vector.load %arg3[%c1_67, %c0_68, %c0_69] : memref<2x1x32xf32, #tpu.memory_space<vmem>>, vector<1x1x32xf32>
    %139 = vector.shape_cast %138 : vector<1x1x32xf32> to vector<1x32xf32>
    %cst_70 = arith.constant dense<0.000000e+00> : vector<16xf32>
    %140 = vector.multi_reduction <add>, %135, %cst_70 [1] : vector<16x32xf32> to vector<16xf32>
    %141 = vector.shape_cast %140 : vector<16xf32> to vector<16x1xf32>
    %cst_71 = arith.constant 3.200000e+01 : f32
    %142 = vector.broadcast %cst_71 : f32 to vector<16x1xf32>
    %143 = arith.divf %141, %142 : vector<16x1xf32>
    %144 = vector.broadcast %143 : vector<16x1xf32> to vector<16x32xf32>
    %145 = arith.subf %135, %144 : vector<16x32xf32>
    %146 = arith.mulf %145, %145 : vector<16x32xf32>
    %cst_72 = arith.constant dense<0.000000e+00> : vector<16xf32>
    %147 = vector.multi_reduction <add>, %146, %cst_72 [1] : vector<16x32xf32> to vector<16xf32>
    %148 = vector.shape_cast %147 : vector<16xf32> to vector<16x1xf32>
    %cst_73 = arith.constant 3.200000e+01 : f32
    %149 = vector.broadcast %cst_73 : f32 to vector<16x1xf32>
    %150 = arith.divf %148, %149 : vector<16x1xf32>
    %151 = vector.broadcast %143 : vector<16x1xf32> to vector<16x32xf32>
    %152 = arith.subf %135, %151 : vector<16x32xf32>
    %cst_74 = arith.constant 9.99999974E-6 : f32
    %153 = vector.broadcast %cst_74 : f32 to vector<16x1xf32>
    %154 = arith.addf %150, %153 : vector<16x1xf32>
    %155 = math.rsqrt %154 : vector<16x1xf32>
    %156 = vector.broadcast %155 : vector<16x1xf32> to vector<16x32xf32>
    %157 = arith.mulf %152, %156 : vector<16x32xf32>
    %158 = vector.broadcast %137 : vector<1x32xf32> to vector<16x32xf32>
    %159 = arith.mulf %157, %158 : vector<16x32xf32>
    %160 = vector.broadcast %139 : vector<1x32xf32> to vector<16x32xf32>
    %161 = arith.addf %159, %160 : vector<16x32xf32>
    %162 = arith.truncf %161 : vector<16x32xf32> to vector<16x32xbf16>
    %c1_75 = arith.constant 1 : index
    %c0_76 = arith.constant 0 : index
    %c0_77 = arith.constant 0 : index
    %163 = vector.load %arg4[%c1_75, %c0_76, %c0_77] : memref<2x32x96xbf16, #tpu.memory_space<vmem>>, vector<1x32x96xbf16>
    %164 = vector.shape_cast %163 : vector<1x32x96xbf16> to vector<32x96xbf16>
    %cst_78 = arith.constant dense<0.000000e+00> : vector<16x96xf32>
    %165 = tpu.matmul %162, %164, %cst_78 {dimension_numbers = #tpu.dot_dimension_numbers<[1], [0], [0], [1], [0, 0, 1, 1], [], []>} : vector<16x32xbf16>, vector<32x96xbf16>, vector<16x96xf32> -> vector<16x96xf32>
    %c1_79 = arith.constant 1 : index
    %c0_80 = arith.constant 0 : index
    %c0_81 = arith.constant 0 : index
    %166 = vector.load %arg5[%c1_79, %c0_80, %c0_81] : memref<2x1x96xf32, #tpu.memory_space<vmem>>, vector<1x1x96xf32>
    %167 = vector.shape_cast %166 : vector<1x1x96xf32> to vector<1x96xf32>
    %168 = vector.broadcast %167 : vector<1x96xf32> to vector<16x96xf32>
    %169 = arith.addf %165, %168 : vector<16x96xf32>
    %170 = vector.extract_strided_slice %169 {offsets = [0, 0], sizes = [16, 16], strides = [1, 1]} : vector<16x96xf32> to vector<16x16xf32>
    %171 = vector.extract_strided_slice %169 {offsets = [0, 16], sizes = [16, 16], strides = [1, 1]} : vector<16x96xf32> to vector<16x16xf32>
    %172 = tpu.concatenate %170, %171 in 0 : vector<16x16xf32>, vector<16x16xf32> -> vector<32x16xf32>
    %173 = vector.extract_strided_slice %169 {offsets = [0, 32], sizes = [16, 16], strides = [1, 1]} : vector<16x96xf32> to vector<16x16xf32>
    %174 = vector.extract_strided_slice %169 {offsets = [0, 48], sizes = [16, 16], strides = [1, 1]} : vector<16x96xf32> to vector<16x16xf32>
    %175 = tpu.concatenate %173, %174 in 0 : vector<16x16xf32>, vector<16x16xf32> -> vector<32x16xf32>
    %176 = vector.extract_strided_slice %169 {offsets = [0, 64], sizes = [16, 16], strides = [1, 1]} : vector<16x96xf32> to vector<16x16xf32>
    %177 = vector.extract_strided_slice %169 {offsets = [0, 80], sizes = [16, 16], strides = [1, 1]} : vector<16x96xf32> to vector<16x16xf32>
    %178 = tpu.concatenate %176, %177 in 0 : vector<16x16xf32>, vector<16x16xf32> -> vector<32x16xf32>
    %179 = arith.truncf %172 : vector<32x16xf32> to vector<32x16xbf16>
    %180 = arith.truncf %175 : vector<32x16xf32> to vector<32x16xbf16>
    %cst_82 = arith.constant dense<0.000000e+00> : vector<32x32xf32>
    %181 = tpu.matmul %179, %180, %cst_82 {dimension_numbers = #tpu.dot_dimension_numbers<[1], [1], [0], [0], [0, 0, 1, 0], [], []>} : vector<32x16xbf16>, vector<32x16xbf16>, vector<32x32xf32> -> vector<32x32xf32>
    %cst_83 = arith.constant 2.500000e-01 : f32
    %182 = vector.broadcast %cst_83 : f32 to vector<32x32xf32>
    %183 = arith.mulf %181, %182 : vector<32x32xf32>
    %184 = arith.addf %183, %1 : vector<32x32xf32>
    %cst_84 = arith.constant dense<0xFF800000> : vector<32xf32>
    %185 = vector.multi_reduction <maximumf>, %184, %cst_84 [1] : vector<32x32xf32> to vector<32xf32>
    %186 = vector.shape_cast %185 : vector<32xf32> to vector<32x1xf32>
    %187 = vector.broadcast %186 : vector<32x1xf32> to vector<32x32xf32>
    %188 = arith.subf %184, %187 : vector<32x32xf32>
    %189 = math.exp %188 : vector<32x32xf32>
    %cst_85 = arith.constant dense<0.000000e+00> : vector<32xf32>
    %190 = vector.multi_reduction <add>, %189, %cst_85 [1] : vector<32x32xf32> to vector<32xf32>
    %191 = vector.shape_cast %190 : vector<32xf32> to vector<32x1xf32>
    %192 = tpu.reciprocal %191 {approx = true} : vector<32x1xf32> -> vector<32x1xf32>
    %193 = vector.broadcast %192 : vector<32x1xf32> to vector<32x32xf32>
    %194 = arith.mulf %189, %193 : vector<32x32xf32>
    %195 = arith.truncf %194 : vector<32x32xf32> to vector<32x32xbf16>
    %196 = arith.truncf %178 : vector<32x16xf32> to vector<32x16xbf16>
    %cst_86 = arith.constant dense<0.000000e+00> : vector<32x16xf32>
    %197 = tpu.matmul %195, %196, %cst_86 {dimension_numbers = #tpu.dot_dimension_numbers<[1], [0], [0], [1], [0, 0, 1, 1], [], []>} : vector<32x32xbf16>, vector<32x16xbf16>, vector<32x16xf32> -> vector<32x16xf32>
    %198 = vector.extract_strided_slice %197 {offsets = [0, 0], sizes = [16, 16], strides = [1, 1]} : vector<32x16xf32> to vector<16x16xf32>
    %199 = arith.truncf %198 : vector<16x16xf32> to vector<16x16xbf16>
    %c2 = arith.constant 2 : index
    %c0_87 = arith.constant 0 : index
    %c0_88 = arith.constant 0 : index
    %200 = vector.load %arg6[%c2, %c0_87, %c0_88] : memref<4x16x32xbf16, #tpu.memory_space<vmem>>, vector<1x16x32xbf16>
    %201 = vector.shape_cast %200 : vector<1x16x32xbf16> to vector<16x32xbf16>
    %cst_89 = arith.constant dense<0.000000e+00> : vector<16x32xf32>
    %202 = tpu.matmul %199, %201, %cst_89 {dimension_numbers = #tpu.dot_dimension_numbers<[1], [0], [0], [1], [0, 0, 1, 1], [], []>} : vector<16x16xbf16>, vector<16x32xbf16>, vector<16x32xf32> -> vector<16x32xf32>
    %203 = arith.addf %135, %202 : vector<16x32xf32>
    %204 = vector.extract_strided_slice %197 {offsets = [16, 0], sizes = [16, 16], strides = [1, 1]} : vector<32x16xf32> to vector<16x16xf32>
    %205 = arith.truncf %204 : vector<16x16xf32> to vector<16x16xbf16>
    %c3 = arith.constant 3 : index
    %c0_90 = arith.constant 0 : index
    %c0_91 = arith.constant 0 : index
    %206 = vector.load %arg6[%c3, %c0_90, %c0_91] : memref<4x16x32xbf16, #tpu.memory_space<vmem>>, vector<1x16x32xbf16>
    %207 = vector.shape_cast %206 : vector<1x16x32xbf16> to vector<16x32xbf16>
    %cst_92 = arith.constant dense<0.000000e+00> : vector<16x32xf32>
    %208 = tpu.matmul %205, %207, %cst_92 {dimension_numbers = #tpu.dot_dimension_numbers<[1], [0], [0], [1], [0, 0, 1, 1], [], []>} : vector<16x16xbf16>, vector<16x32xbf16>, vector<16x32xf32> -> vector<16x32xf32>
    %209 = arith.addf %203, %208 : vector<16x32xf32>
    %c1_93 = arith.constant 1 : index
    %c0_94 = arith.constant 0 : index
    %c0_95 = arith.constant 0 : index
    %210 = vector.load %arg7[%c1_93, %c0_94, %c0_95] : memref<2x1x32xf32, #tpu.memory_space<vmem>>, vector<1x1x32xf32>
    %211 = vector.shape_cast %210 : vector<1x1x32xf32> to vector<1x32xf32>
    %212 = vector.broadcast %211 : vector<1x32xf32> to vector<16x32xf32>
    %213 = arith.addf %209, %212 : vector<16x32xf32>
    %c1_96 = arith.constant 1 : index
    %c0_97 = arith.constant 0 : index
    %c0_98 = arith.constant 0 : index
    %214 = vector.load %arg8[%c1_96, %c0_97, %c0_98] : memref<2x1x32xf32, #tpu.memory_space<vmem>>, vector<1x1x32xf32>
    %215 = vector.shape_cast %214 : vector<1x1x32xf32> to vector<1x32xf32>
    %c1_99 = arith.constant 1 : index
    %c0_100 = arith.constant 0 : index
    %c0_101 = arith.constant 0 : index
    %216 = vector.load %arg9[%c1_99, %c0_100, %c0_101] : memref<2x1x32xf32, #tpu.memory_space<vmem>>, vector<1x1x32xf32>
    %217 = vector.shape_cast %216 : vector<1x1x32xf32> to vector<1x32xf32>
    %cst_102 = arith.constant dense<0.000000e+00> : vector<16xf32>
    %218 = vector.multi_reduction <add>, %213, %cst_102 [1] : vector<16x32xf32> to vector<16xf32>
    %219 = vector.shape_cast %218 : vector<16xf32> to vector<16x1xf32>
    %cst_103 = arith.constant 3.200000e+01 : f32
    %220 = vector.broadcast %cst_103 : f32 to vector<16x1xf32>
    %221 = arith.divf %219, %220 : vector<16x1xf32>
    %222 = vector.broadcast %221 : vector<16x1xf32> to vector<16x32xf32>
    %223 = arith.subf %213, %222 : vector<16x32xf32>
    %224 = arith.mulf %223, %223 : vector<16x32xf32>
    %cst_104 = arith.constant dense<0.000000e+00> : vector<16xf32>
    %225 = vector.multi_reduction <add>, %224, %cst_104 [1] : vector<16x32xf32> to vector<16xf32>
    %226 = vector.shape_cast %225 : vector<16xf32> to vector<16x1xf32>
    %cst_105 = arith.constant 3.200000e+01 : f32
    %227 = vector.broadcast %cst_105 : f32 to vector<16x1xf32>
    %228 = arith.divf %226, %227 : vector<16x1xf32>
    %229 = vector.broadcast %221 : vector<16x1xf32> to vector<16x32xf32>
    %230 = arith.subf %213, %229 : vector<16x32xf32>
    %cst_106 = arith.constant 9.99999974E-6 : f32
    %231 = vector.broadcast %cst_106 : f32 to vector<16x1xf32>
    %232 = arith.addf %228, %231 : vector<16x1xf32>
    %233 = math.rsqrt %232 : vector<16x1xf32>
    %234 = vector.broadcast %233 : vector<16x1xf32> to vector<16x32xf32>
    %235 = arith.mulf %230, %234 : vector<16x32xf32>
    %236 = vector.broadcast %215 : vector<1x32xf32> to vector<16x32xf32>
    %237 = arith.mulf %235, %236 : vector<16x32xf32>
    %238 = vector.broadcast %217 : vector<1x32xf32> to vector<16x32xf32>
    %239 = arith.addf %237, %238 : vector<16x32xf32>
    %240 = arith.truncf %239 : vector<16x32xf32> to vector<16x32xbf16>
    %c1_107 = arith.constant 1 : index
    %c0_108 = arith.constant 0 : index
    %c0_109 = arith.constant 0 : index
    %241 = vector.load %arg10[%c1_107, %c0_108, %c0_109] : memref<2x32x128xbf16, #tpu.memory_space<vmem>>, vector<1x32x128xbf16>
    %242 = vector.shape_cast %241 : vector<1x32x128xbf16> to vector<32x128xbf16>
    %cst_110 = arith.constant dense<0.000000e+00> : vector<16x128xf32>
    %243 = tpu.matmul %240, %242, %cst_110 {dimension_numbers = #tpu.dot_dimension_numbers<[1], [0], [0], [1], [0, 0, 1, 1], [], []>} : vector<16x32xbf16>, vector<32x128xbf16>, vector<16x128xf32> -> vector<16x128xf32>
    %c1_111 = arith.constant 1 : index
    %c0_112 = arith.constant 0 : index
    %c0_113 = arith.constant 0 : index
    %244 = vector.load %arg11[%c1_111, %c0_112, %c0_113] : memref<2x1x128xf32, #tpu.memory_space<vmem>>, vector<1x1x128xf32>
    %245 = vector.shape_cast %244 : vector<1x1x128xf32> to vector<1x128xf32>
    %246 = vector.broadcast %245 : vector<1x128xf32> to vector<16x128xf32>
    %247 = arith.addf %243, %246 : vector<16x128xf32>
    %cst_114 = arith.constant 5.000000e-01 : f32
    %248 = vector.broadcast %cst_114 : f32 to vector<16x128xf32>
    %249 = arith.mulf %248, %247 : vector<16x128xf32>
    %cst_115 = arith.constant 4.471500e-02 : f32
    %250 = vector.broadcast %cst_115 : f32 to vector<16x128xf32>
    %251 = arith.mulf %250, %247 : vector<16x128xf32>
    %252 = arith.mulf %251, %247 : vector<16x128xf32>
    %253 = arith.mulf %252, %247 : vector<16x128xf32>
    %254 = arith.addf %247, %253 : vector<16x128xf32>
    %cst_116 = arith.constant 0.797884583 : f32
    %255 = vector.broadcast %cst_116 : f32 to vector<16x128xf32>
    %256 = arith.mulf %255, %254 : vector<16x128xf32>
    %257 = math.tanh %256 : vector<16x128xf32>
    %cst_117 = arith.constant 1.000000e+00 : f32
    %258 = vector.broadcast %cst_117 : f32 to vector<16x128xf32>
    %259 = arith.addf %258, %257 : vector<16x128xf32>
    %260 = arith.mulf %249, %259 : vector<16x128xf32>
    %261 = arith.truncf %260 : vector<16x128xf32> to vector<16x128xbf16>
    %c1_118 = arith.constant 1 : index
    %c0_119 = arith.constant 0 : index
    %c0_120 = arith.constant 0 : index
    %262 = vector.load %arg12[%c1_118, %c0_119, %c0_120] : memref<2x128x32xbf16, #tpu.memory_space<vmem>>, vector<1x128x32xbf16>
    %263 = vector.shape_cast %262 : vector<1x128x32xbf16> to vector<128x32xbf16>
    %cst_121 = arith.constant dense<0.000000e+00> : vector<16x32xf32>
    %264 = tpu.matmul %261, %263, %cst_121 {dimension_numbers = #tpu.dot_dimension_numbers<[1], [0], [0], [1], [0, 0, 1, 1], [], []>} : vector<16x128xbf16>, vector<128x32xbf16>, vector<16x32xf32> -> vector<16x32xf32>
    %c1_122 = arith.constant 1 : index
    %c0_123 = arith.constant 0 : index
    %c0_124 = arith.constant 0 : index
    %265 = vector.load %arg13[%c1_122, %c0_123, %c0_124] : memref<2x1x32xf32, #tpu.memory_space<vmem>>, vector<1x1x32xf32>
    %266 = vector.shape_cast %265 : vector<1x1x32xf32> to vector<1x32xf32>
    %267 = vector.broadcast %266 : vector<1x32xf32> to vector<16x32xf32>
    %268 = arith.addf %264, %267 : vector<16x32xf32>
    %269 = arith.addf %213, %268 : vector<16x32xf32>
    %c0_125 = arith.constant 0 : index
    %c0_126 = arith.constant 0 : index
    %270 = vector.load %arg14[%c0_125, %c0_126] : memref<1x32xf32, #tpu.memory_space<vmem>>, vector<1x32xf32>
    %c0_127 = arith.constant 0 : index
    %c0_128 = arith.constant 0 : index
    %271 = vector.load %arg15[%c0_127, %c0_128] : memref<1x32xf32, #tpu.memory_space<vmem>>, vector<1x32xf32>
    %cst_129 = arith.constant dense<0.000000e+00> : vector<16xf32>
    %272 = vector.multi_reduction <add>, %269, %cst_129 [1] : vector<16x32xf32> to vector<16xf32>
    %273 = vector.shape_cast %272 : vector<16xf32> to vector<16x1xf32>
    %cst_130 = arith.constant 3.200000e+01 : f32
    %274 = vector.broadcast %cst_130 : f32 to vector<16x1xf32>
    %275 = arith.divf %273, %274 : vector<16x1xf32>
    %276 = vector.broadcast %275 : vector<16x1xf32> to vector<16x32xf32>
    %277 = arith.subf %269, %276 : vector<16x32xf32>
    %278 = arith.mulf %277, %277 : vector<16x32xf32>
    %cst_131 = arith.constant dense<0.000000e+00> : vector<16xf32>
    %279 = vector.multi_reduction <add>, %278, %cst_131 [1] : vector<16x32xf32> to vector<16xf32>
    %280 = vector.shape_cast %279 : vector<16xf32> to vector<16x1xf32>
    %cst_132 = arith.constant 3.200000e+01 : f32
    %281 = vector.broadcast %cst_132 : f32 to vector<16x1xf32>
    %282 = arith.divf %280, %281 : vector<16x1xf32>
    %283 = vector.broadcast %275 : vector<16x1xf32> to vector<16x32xf32>
    %284 = arith.subf %269, %283 : vector<16x32xf32>
    %cst_133 = arith.constant 9.99999974E-6 : f32
    %285 = vector.broadcast %cst_133 : f32 to vector<16x1xf32>
    %286 = arith.addf %282, %285 : vector<16x1xf32>
    %287 = math.rsqrt %286 : vector<16x1xf32>
    %288 = vector.broadcast %287 : vector<16x1xf32> to vector<16x32xf32>
    %289 = arith.mulf %284, %288 : vector<16x32xf32>
    %290 = vector.broadcast %270 : vector<1x32xf32> to vector<16x32xf32>
    %291 = arith.mulf %289, %290 : vector<16x32xf32>
    %292 = vector.broadcast %271 : vector<1x32xf32> to vector<16x32xf32>
    %293 = arith.addf %291, %292 : vector<16x32xf32>
    %294 = arith.truncf %293 : vector<16x32xf32> to vector<16x32xbf16>
    %c0_134 = arith.constant 0 : index
    %c0_135 = arith.constant 0 : index
    %295 = vector.load %arg16[%c0_134, %c0_135] : memref<32x128xbf16, #tpu.memory_space<vmem>>, vector<32x128xbf16>
    %cst_136 = arith.constant dense<0.000000e+00> : vector<16x128xf32>
    %296 = tpu.matmul %294, %295, %cst_136 {dimension_numbers = #tpu.dot_dimension_numbers<[1], [0], [0], [1], [0, 0, 1, 1], [], []>} : vector<16x32xbf16>, vector<32x128xbf16>, vector<16x128xf32> -> vector<16x128xf32>
    %c0_137 = arith.constant 0 : index
    %c0_138 = arith.constant 0 : index
    %297 = vector.load %arg17[%c0_137, %c0_138] : memref<16x128xf32, #tpu.memory_space<vmem>>, vector<16x128xf32>
    tpu.vector_store %arg17[%c0_137, %c0_138], %296 {strides = array<i32>} : memref<16x128xf32, #tpu.memory_space<vmem>>, vector<16x128xf32>,
    return
  }
}

</mosaic_0001>

<llo_original>
// kernel: gpt_forward.1
$region0: #{gpt_forward.1}
  #allocation0 [shape = 'u32[]', space=smem, size = 0x4, offset = 0x4, fixed_abs, tag = 'smem constant byte address 0x4 - core index']
  #allocation1 [shape = 'u32[144,128]{1,0:T(1,128)}', space=vmem, size = 0x12000, scoped, tag = 'internal scratch']
  %s0 = inlined_call_operand.vmem [shape: f32[16,32], index: 0, kind: input, shape index: {}]
  %s1 = inlined_call_operand.vmem [shape: f32[32,32], index: 1, kind: input, shape index: {}]
  %s2 = inlined_call_operand.vmem [shape: f32[2,1,32], index: 2, kind: input, shape index: {}]
  %s3 = inlined_call_operand.vmem [shape: f32[2,1,32], index: 3, kind: input, shape index: {}]
  %s4 = inlined_call_operand.vmem [shape: bf16[2,32,96], index: 4, kind: input, shape index: {}]
  %s5 = inlined_call_operand.vmem [shape: f32[2,1,96], index: 5, kind: input, shape index: {}]
  %s6 = inlined_call_operand.vmem [shape: bf16[4,16,32], index: 6, kind: input, shape index: {}]
  %s7 = inlined_call_operand.vmem [shape: f32[2,1,32], index: 7, kind: input, shape index: {}]
  %s8 = inlined_call_operand.vmem [shape: f32[2,1,32], index: 8, kind: input, shape index: {}]
  %s9 = inlined_call_operand.vmem [shape: f32[2,1,32], index: 9, kind: input, shape index: {}]
  %s10 = inlined_call_operand.vmem [shape: bf16[2,32,128], index: 10, kind: input, shape index: {}]
  %s11 = inlined_call_operand.vmem [shape: f32[2,1,128], index: 11, kind: input, shape index: {}]
  %s12 = inlined_call_operand.vmem [shape: bf16[2,128,32], index: 12, kind: input, shape index: {}]
  %s13 = inlined_call_operand.vmem [shape: f32[2,1,32], index: 13, kind: input, shape index: {}]
  %s14 = inlined_call_operand.vmem [shape: f32[1,32], index: 14, kind: input, shape index: {}]
  %s15 = inlined_call_operand.vmem [shape: f32[1,32], index: 15, kind: input, shape index: {}]
  %s16 = inlined_call_operand.vmem [shape: bf16[32,128], index: 16, kind: input, shape index: {}]
  %s17 = inlined_call_operand.hbm [shape: f32[16,128], index: 17, kind: output, shape index: {}]
  %s18 = sld [smem:[#allocation0]]
  $region78: #{gpt_forward.1} parent=0
    _
  %s20 = ssub.s32 1, %s18
  %s21 = scalar_select 0, %s20, %s18
  $region1: #{gpt_forward.1} parent=0
    #allocation2 [shape = 'u8[8192]{0}', space=vmem, size = 0x2000, scoped, tag = 'output window, operand 0, single buffered']
    #allocation3 [shape = 's32[1]{0}', space=sflag, size = 0x4, scoped, tag = 'scoped memory for gpt_forward.1']
    %22 = vsyncpa [#allocation3], 0
    // Predicated region
    $region2: #{gpt_forward.1} parent=1 // pred_check
      _
    $region3: #{gpt_forward.1} parent=1 // pred_check_branch
      %24 = sbr.rel (0) target = $region5
    $region4: #{gpt_forward.1} parent=1 // pred_region
      _
    $region5: #{gpt_forward.1} parent=1 // pred_fallthru
      _
    // Predicated region
    $region6: #{gpt_forward.1} parent=1 // pred_check
      _
    $region7: #{gpt_forward.1} parent=1 // pred_check_branch
      %26 = sbr.rel (0) target = $region9
    $region8: #{gpt_forward.1} parent=1 // pred_region
      _
    $region9: #{gpt_forward.1} parent=1 // pred_fallthru
      _
    // Predicated region
    $region10: #{gpt_forward.1} parent=1 // pred_check
      _
    $region11: #{gpt_forward.1} parent=1 // pred_check_branch
      %28 = sbr.rel (0) target = $region13
    $region12: #{gpt_forward.1} parent=1 // pred_region
      _
    $region13: #{gpt_forward.1} parent=1 // pred_fallthru
      _
    // Predicated region
    $region14: #{gpt_forward.1} parent=1 // pred_check
      _
    $region15: #{gpt_forward.1} parent=1 // pred_check_branch
      %30 = sbr.rel (0) target = $region17
    $region16: #{gpt_forward.1} parent=1 // pred_region
      _
    $region17: #{gpt_forward.1} parent=1 // pred_fallthru
      _
    // Predicated region
    $region18: #{gpt_forward.1} parent=1 // pred_check
      _
    $region19: #{gpt_forward.1} parent=1 // pred_check_branch
      %32 = sbr.rel (0) target = $region21
    $region20: #{gpt_forward.1} parent=1 // pred_region
      _
    $region21: #{gpt_forward.1} parent=1 // pred_fallthru
      _
    // Predicated region
    $region22: #{gpt_forward.1} parent=1 // pred_check
      _
    $region23: #{gpt_forward.1} parent=1 // pred_check_branch
      %34 = sbr.rel (0) target = $region25
    $region24: #{gpt_forward.1} parent=1 // pred_region
      _
    $region25: #{gpt_forward.1} parent=1 // pred_fallthru
      _
    // Predicated region
    $region26: #{gpt_forward.1} parent=1 // pred_check
      _
    $region27: #{gpt_forward.1} parent=1 // pred_check_branch
      %36 = sbr.rel (0) target = $region29
    $region28: #{gpt_forward.1} parent=1 // pred_region
      _
    $region29: #{gpt_forward.1} parent=1 // pred_fallthru
      _
    // Predicated region
    $region30: #{gpt_forward.1} parent=1 // pred_check
      _
    $region31: #{gpt_forward.1} parent=1 // pred_check_branch
      %38 = sbr.rel (0) target = $region33
    $region32: #{gpt_forward.1} parent=1 // pred_region
      _
    $region33: #{gpt_forward.1} parent=1 // pred_fallthru
      _
    // Predicated region
    $region34: #{gpt_forward.1} parent=1 // pred_check
      _
    $region35: #{gpt_forward.1} parent=1 // pred_check_branch
      %40 = sbr.rel (0) target = $region37
    $region36: #{gpt_forward.1} parent=1 // pred_region
      _
    $region37: #{gpt_forward.1} parent=1 // pred_fallthru
      _
    // Predicated region
    $region38: #{gpt_forward.1} parent=1 // pred_check
      _
    $region39: #{gpt_forward.1} parent=1 // pred_check_branch
      %42 = sbr.rel (0) target = $region41
    $region40: #{gpt_forward.1} parent=1 // pred_region
      _
    $region41: #{gpt_forward.1} parent=1 // pred_fallthru
      _
    // Predicated region
    $region42: #{gpt_forward.1} parent=1 // pred_check
      _
    $region43: #{gpt_forward.1} parent=1 // pred_check_branch
      %44 = sbr.rel (0) target = $region45
    $region44: #{gpt_forward.1} parent=1 // pred_region
      _
    $region45: #{gpt_forward.1} parent=1 // pred_fallthru
      _
    // Predicated region
    $region46: #{gpt_forward.1} parent=1 // pred_check
      _
    $region47: #{gpt_forward.1} parent=1 // pred_check_branch
      %46 = sbr.rel (0) target = $region49
    $region48: #{gpt_forward.1} parent=1 // pred_region
      _
    $region49: #{gpt_forward.1} parent=1 // pred_fallthru
      _
    // Predicated region
    $region50: #{gpt_forward.1} parent=1 // pred_check
      _
    $region51: #{gpt_forward.1} parent=1 // pred_check_branch
      %48 = sbr.rel (0) target = $region53
    $region52: #{gpt_forward.1} parent=1 // pred_region
      _
    $region53: #{gpt_forward.1} parent=1 // pred_fallthru
      _
    // Predicated region
    $region54: #{gpt_forward.1} parent=1 // pred_check
      _
    $region55: #{gpt_forward.1} parent=1 // pred_check_branch
      %50 = sbr.rel (0) target = $region57
    $region56: #{gpt_forward.1} parent=1 // pred_region
      _
    $region57: #{gpt_forward.1} parent=1 // pred_fallthru
      _
    // Predicated region
    $region58: #{gpt_forward.1} parent=1 // pred_check
      _
    $region59: #{gpt_forward.1} parent=1 // pred_check_branch
      %52 = sbr.rel (0) target = $region61
    $region60: #{gpt_forward.1} parent=1 // pred_region
      _
    $region61: #{gpt_forward.1} parent=1 // pred_fallthru
      _
    // Predicated region
    $region62: #{gpt_forward.1} parent=1 // pred_check
      _
    $region63: #{gpt_forward.1} parent=1 // pred_check_branch
      %54 = sbr.rel (0) target = $region65
    $region64: #{gpt_forward.1} parent=1 // pred_region
      _
    $region65: #{gpt_forward.1} parent=1 // pred_fallthru
      _
    // Predicated region
    $region66: #{gpt_forward.1} parent=1 // pred_check
      _
    $region67: #{gpt_forward.1} parent=1 // pred_check_branch
      %56 = sbr.rel (0) target = $region69
    $region68: #{gpt_forward.1} parent=1 // pred_region
      _
    $region69: #{gpt_forward.1} parent=1 // pred_fallthru
      _
    %v58 = vld [vmem:[%s0] sm:$0xff]
    %v59 = vld [vmem:[%s0 + $0x8] sm:$0xff]
    %v60 = vld [vmem:[%s1] sm:$0xff]
    %v61 = vld [vmem:[%s1 + $0x8] sm:$0xff]
    %v62 = vld [vmem:[%s1 + $0x10] sm:$0xff]
    %v63 = vld [vmem:[%s1 + $0x18] sm:$0xff]
    %v64 = vld [vmem:[%s2] sm:$0x1]
    %v65 = vld [vmem:[%s3] sm:$0x1]
    %vm66 = vcmask 261120
    %v67 = vsel %vm66, %v58, 0.0
    %68 = vadd.xlane.f32.xlu0 %v67
    %v69 = vpop.xlane.xlu0 %68
    %v70 = vsel %vm66, %v59, 0.0
    %71 = vadd.xlane.f32.xlu0 %v70
    %v72 = vpop.xlane.xlu0 %71
    %v73 = vrcp.pop 32.0
    %v74 = vmul.f32 %v69, %v73
    %v75 = vmul.f32 %v72, %v73
    %v76 = vsub.f32 %v58, %v74
    %v77 = vsub.f32 %v59, %v75
    %v78 = vmul.f32 %v76, %v76
    %v79 = vmul.f32 %v77, %v77
    %v80 = vsel %vm66, %v78, 0.0
    %81 = vadd.xlane.f32.xlu0 %v80
    %v82 = vpop.xlane.xlu0 %81
    %v83 = vsel %vm66, %v79, 0.0
    %84 = vadd.xlane.f32.xlu0 %v83
    %v85 = vpop.xlane.xlu0 %84
    %v86 = vmul.f32 %v82, %v73
    %v87 = vmul.f32 %v85, %v73
    %v88 = vadd.f32 %v86, 1e-05
    %v89 = vadd.f32 %v87, 1e-05
    %v90 = vrsqrt.pop %v88
    %v91 = vrsqrt.pop %v89
    %v92 = vmul.f32 %v76, %v90
    %v93 = vmul.f32 %v77, %v91
    %v95 = vlaneseq
    %v96 = vshrl.u32 %v95, 7
    %v97 = vsub.s32 0, %v96
    %v98 = vrot.slane %v64, %v97
    %v100 = vmul.f32 %v92, %v98
    %v101 = vmul.f32 %v93, %v98
    %v103 = vlaneseq
    %v104 = vshrl.u32 %v103, 7
    %v105 = vsub.s32 0, %v104
    %v106 = vrot.slane %v65, %v105
    %v108 = vadd.f32 %v100, %v106
    %v109 = vadd.f32 %v101, %v106
    %v110 = vpack.c.bf16 %v109, %v108
    %v111 = vld [vmem:[%s4] sm:$0xf]
    %v112 = vld [vmem:[%s4 + $0x4] sm:$0xf]
    %v113 = vld [vmem:[%s4 + $0x8] sm:$0xf]
    %v114 = vld [vmem:[%s4 + $0xc] sm:$0xf]
    %v115 = vld [vmem:[%s5] sm:$0x1]
    %v117 = vlaneseq
    %v118 = vshrl.u32 %v117, 7
    %v119 = vsub.s32 0, %v118
    %v120 = vrot.slane %v115, %v119
    %v126 = vunpack.c.l.b16 %v111
    %v127 = vunpack.c.l.b16 %v112
    %v128 = vunpack.c.l.b16 %v113
    %v129 = vunpack.c.l.b16 %v114
    %v130 = vpack.c.b16 %v127, %v126
    %v131 = vpack.c.b16 %v129, %v128
    %v135 = vsel %vm66, %v110, 0
    %137 = vmatprep.subr.bf16.mxu0 0
    %138 = vmatpush1.bf16.msra.mxu0 %v130
    %139 = vmatprep.subr.bf16.mxu0 0
    %140 = vmatpush1.bf16.msra.mxu0 %v131
    %141 = vmatprep.subr.bf16.mxu0 0
    %142 = vmatpush1.bf16.msra.mxu0 0
    %143 = vmatprep.subr.bf16.mxu0 0
    %144 = vmatpush1.bf16.msra.mxu0 0
    %145 = vmatprep.subr.bf16.mxu0 0
    %146 = vmatpush1.bf16.msra.mxu0 0
    %147 = vmatprep.subr.bf16.mxu0 0
    %148 = vmatpush1.bf16.msra.mxu0 0
    %149 = vmatprep.subr.bf16.mxu0 0
    %150 = vmatpush1.bf16.msra.mxu0 0
    %151 = vmatprep.subr.bf16.mxu0 0
    %152 = vmatpush1.bf16.msra.mxu0 0
    %153 = vmatprep.subr.bf16.mxu0 0
    %154 = vmatpush1.bf16.msra.mxu0 0
    %155 = vmatprep.subr.bf16.mxu0 0
    %156 = vmatpush1.bf16.msra.mxu0 0
    %157 = vmatprep.subr.bf16.mxu0 0
    %158 = vmatpush1.bf16.msra.mxu0 0
    %159 = vmatprep.subr.bf16.mxu0 0
    %160 = vmatpush1.bf16.msra.mxu0 0
    %161 = vmatprep.subr.bf16.mxu0 0
    %162 = vmatpush1.bf16.msra.mxu0 0
    %163 = vmatprep.subr.bf16.mxu0 0
    %164 = vmatpush1.bf16.msra.mxu0 0
    %165 = vmatprep.subr.bf16.mxu0 0
    %166 = vmatpush1.bf16.msra.mxu0 0
    %167 = vmatprep.subr.bf16.mxu0 0
    %168 = vmatpush1.bf16.msra.mxu0 0
    %169 = vmatprep.mubr.bf16.mxu0 0
    %170 = vmatmul.mubr.bf16.gmra.mrb[0].mxu0 %v135
    %v171 = vpop.f32.mrb[0].mxu0
    %v172 = vadd.f32 %v120, %v171
    %v173 = vpop.f32.mrb[0].mxu0
    %v174 = vpop.f32.mrb[0].mxu0
    %v175 = vadd.f32 %v120, %v174
    %v176 = vpop.f32.mrb[0].mxu0
    %177 = vdwg.mxu0
    %180 = vrot.lane.b32.xlu0 %v172, 112
    %v181 = vpop.permute.xlu0 %180
    %182 = vrot.lane.b32.xlu0 %v175, 112
    %v183 = vpop.permute.xlu0 %182
    %v186 = vpack.c.bf16 %v175, %v172
    %v187 = vpack.c.bf16 %v183, %v181
    %190 = vrot.lane.b32.xlu0 %v186, 96
    %v191 = vpop.permute.xlu0 %190
    %192 = vrot.lane.b32.xlu0 %v187, 96
    %v193 = vpop.permute.xlu0 %192
    %vm194 = vcmask 130048
    %v196 = vsel %vm194, %v186, 0
    %v199 = vsel %vm194, %v187, 0
    %v202 = vsel %vm194, %v191, 0
    %v205 = vsel %vm194, %v193, 0
    %207 = vmatprep.subr.bf16.mxu0 0
    %208 = vmatpush1.bf16.xpose.msra.mxu0 %v202
    %209 = vmatprep.subr.bf16.mxu0 0
    %210 = vmatpush1.bf16.xpose.msra.mxu0 %v205
    %211 = vmatprep.subr.bf16.mxu0 0
    %212 = vmatpush1.bf16.xpose.msra.mxu0 0
    %213 = vmatprep.subr.bf16.mxu0 0
    %214 = vmatpush1.bf16.xpose.msra.mxu0 0
    %215 = vmatprep.subr.bf16.mxu0 0
    %216 = vmatpush1.bf16.xpose.msra.mxu0 0
    %217 = vmatprep.subr.bf16.mxu0 0
    %218 = vmatpush1.bf16.xpose.msra.mxu0 0
    %219 = vmatprep.subr.bf16.mxu0 0
    %220 = vmatpush1.bf16.xpose.msra.mxu0 0
    %221 = vmatprep.subr.bf16.mxu0 0
    %222 = vmatpush1.bf16.xpose.msra.mxu0 0
    %223 = vmatprep.subr.bf16.mxu0 0
    %224 = vmatpush1.bf16.xpose.msra.mxu0 0
    %225 = vmatprep.subr.bf16.mxu0 0
    %226 = vmatpush1.bf16.xpose.msra.mxu0 0
    %227 = vmatprep.subr.bf16.mxu0 0
    %228 = vmatpush1.bf16.xpose.msra.mxu0 0
    %229 = vmatprep.subr.bf16.mxu0 0
    %230 = vmatpush1.bf16.xpose.msra.mxu0 0
    %231 = vmatprep.subr.bf16.mxu0 0
    %232 = vmatpush1.bf16.xpose.msra.mxu0 0
    %233 = vmatprep.subr.bf16.mxu0 0
    %234 = vmatpush1.bf16.xpose.msra.mxu0 0
    %235 = vmatprep.subr.bf16.mxu0 0
    %236 = vmatpush1.bf16.xpose.msra.mxu0 0
    %237 = vmatprep.subr.bf16.mxu0 0
    %238 = vmatpush1.bf16.xpose.msra.mxu0 0
    %239 = vmatprep.mubr.bf16.mxu0 0
    %240 = vmatmul.mubr.bf16.gmra.mrb[0].mxu0 %v196
    %v241 = vpop.f32.mrb[0].mxu0
    %v242 = vadd.f32 0.0, %v241
    %v243 = vpop.f32.mrb[0].mxu0
    %v244 = vpop.f32.mrb[0].mxu0
    %v245 = vadd.f32 0.0, %v244
    %v246 = vpop.f32.mrb[0].mxu0
    %247 = vmatprep.mubr.bf16.mxu0 0
    %248 = vmatmul.mubr.bf16.gmra.mrb[0].mxu0 %v199
    %v249 = vpop.f32.mrb[0].mxu0
    %v250 = vadd.f32 0.0, %v249
    %v251 = vpop.f32.mrb[0].mxu0
    %v252 = vpop.f32.mrb[0].mxu0
    %v253 = vadd.f32 0.0, %v252
    %v254 = vpop.f32.mrb[0].mxu0
    %255 = vdwg.mxu0
    %v256 = vmul.f32 %v242, 0.25
    %v257 = vmul.f32 %v245, 0.25
    %v258 = vmul.f32 %v250, 0.25
    %v259 = vmul.f32 %v253, 0.25
    %v260 = vadd.f32 %v256, %v60
    %v261 = vadd.f32 %v257, %v61
    %v262 = vadd.f32 %v258, %v62
    %v263 = vadd.f32 %v259, %v63
    %v264 = vsel %vm66, %v260, -inf
    %265 = vmax.xlane.f32.xlu0 %v264
    %v266 = vpop.xlane.xlu0 %265
    %v267 = vsel %vm66, %v261, -inf
    %268 = vmax.xlane.f32.xlu0 %v267
    %v269 = vpop.xlane.xlu0 %268
    %v270 = vsel %vm66, %v262, -inf
    %271 = vmax.xlane.f32.xlu0 %v270
    %v272 = vpop.xlane.xlu0 %271
    %v273 = vsel %vm66, %v263, -inf
    %274 = vmax.xlane.f32.xlu0 %v273
    %v275 = vpop.xlane.xlu0 %274
    %v276 = vsub.f32 %v260, %v266
    %v277 = vsub.f32 %v261, %v269
    %v278 = vsub.f32 %v262, %v272
    %v279 = vsub.f32 %v263, %v275
    %v280 = vmul.f32 %v276, 1.442695
    %v281 = vpow.pop %v280
    %v282 = vmul.f32 %v277, 1.442695
    %v283 = vpow.pop %v282
    %v284 = vmul.f32 %v278, 1.442695
    %v285 = vpow.pop %v284
    %v286 = vmul.f32 %v279, 1.442695
    %v287 = vpow.pop %v286
    %v288 = vsel %vm66, %v281, 0.0
    %289 = vadd.xlane.f32.xlu0 %v288
    %v290 = vpop.xlane.xlu0 %289
    %v291 = vsel %vm66, %v283, 0.0
    %292 = vadd.xlane.f32.xlu0 %v291
    %v293 = vpop.xlane.xlu0 %292
    %v294 = vsel %vm66, %v285, 0.0
    %295 = vadd.xlane.f32.xlu0 %v294
    %v296 = vpop.xlane.xlu0 %295
    %v297 = vsel %vm66, %v287, 0.0
    %298 = vadd.xlane.f32.xlu0 %v297
    %v299 = vpop.xlane.xlu0 %298
    %v300 = vrcp.pop %v290
    %v301 = vrcp.pop %v293
    %v302 = vrcp.pop %v296
    %v303 = vrcp.pop %v299
    %v304 = vmul.f32 %v281, %v300
    %v305 = vmul.f32 %v283, %v301
    %v306 = vmul.f32 %v285, %v302
    %v307 = vmul.f32 %v287, %v303
    %v308 = vpack.c.bf16 %v305, %v304
    %v309 = vpack.c.bf16 %v307, %v306
    %310 = vrot.lane.b32.xlu0 %v186, 64
    %v311 = vpop.permute.xlu0 %310
    %312 = vrot.lane.b32.xlu0 %v187, 64
    %v313 = vpop.permute.xlu0 %312
    %v317 = vsel %vm66, %v308, 0
    %v320 = vsel %vm66, %v309, 0
    %322 = vmatprep.subr.bf16.mxu0 0
    %323 = vmatpush1.bf16.msra.mxu0 %v311
    %324 = vmatprep.subr.bf16.mxu0 0
    %325 = vmatpush1.bf16.msra.mxu0 %v313
    %326 = vmatprep.subr.bf16.mxu0 0
    %327 = vmatpush1.bf16.msra.mxu0 0
    %328 = vmatprep.subr.bf16.mxu0 0
    %329 = vmatpush1.bf16.msra.mxu0 0
    %330 = vmatprep.subr.bf16.mxu0 0
    %331 = vmatpush1.bf16.msra.mxu0 0
    %332 = vmatprep.subr.bf16.mxu0 0
    %333 = vmatpush1.bf16.msra.mxu0 0
    %334 = vmatprep.subr.bf16.mxu0 0
    %335 = vmatpush1.bf16.msra.mxu0 0
    %336 = vmatprep.subr.bf16.mxu0 0
    %337 = vmatpush1.bf16.msra.mxu0 0
    %338 = vmatprep.subr.bf16.mxu0 0
    %339 = vmatpush1.bf16.msra.mxu0 0
    %340 = vmatprep.subr.bf16.mxu0 0
    %341 = vmatpush1.bf16.msra.mxu0 0
    %342 = vmatprep.subr.bf16.mxu0 0
    %343 = vmatpush1.bf16.msra.mxu0 0
    %344 = vmatprep.subr.bf16.mxu0 0
    %345 = vmatpush1.bf16.msra.mxu0 0
    %346 = vmatprep.subr.bf16.mxu0 0
    %347 = vmatpush1.bf16.msra.mxu0 0
    %348 = vmatprep.subr.bf16.mxu0 0
    %349 = vmatpush1.bf16.msra.mxu0 0
    %350 = vmatprep.subr.bf16.mxu0 0
    %351 = vmatpush1.bf16.msra.mxu0 0
    %352 = vmatprep.subr.bf16.mxu0 0
    %353 = vmatpush1.bf16.msra.mxu0 0
    %354 = vmatprep.mubr.bf16.mxu0 0
    %355 = vmatmul.mubr.bf16.gmra.mrb[0].mxu0 %v317
    %v356 = vpop.f32.mrb[0].mxu0
    %v357 = vadd.f32 0.0, %v356
    %v358 = vpop.f32.mrb[0].mxu0
    %v359 = vpop.f32.mrb[0].mxu0
    %v360 = vadd.f32 0.0, %v359
    %v361 = vpop.f32.mrb[0].mxu0
    %362 = vmatprep.mubr.bf16.mxu0 0
    %363 = vmatmul.mubr.bf16.gmra.mrb[0].mxu0 %v320
    %v364 = vpop.f32.mrb[0].mxu0
    %v365 = vadd.f32 0.0, %v364
    %v366 = vpop.f32.mrb[0].mxu0
    %v367 = vpop.f32.mrb[0].mxu0
    %v368 = vadd.f32 0.0, %v367
    %v369 = vpop.f32.mrb[0].mxu0
    %370 = vdwg.mxu0
    %v371 = vpack.c.bf16 %v360, %v357
    %v372 = vld [vmem:[%s6] sm:$0xf]
    %v373 = vld [vmem:[%s6 + $0x4] sm:$0xf]
    %v376 = vunpack.c.l.b16 %v372
    %v377 = vunpack.c.l.b16 %v373
    %v378 = vpack.c.b16 %v377, %v376
    %v381 = vsel %vm194, %v371, 0
    %383 = vmatprep.subr.bf16.mxu0 0
    %384 = vmatpush1.bf16.msra.mxu0 %v378
    %385 = vmatprep.subr.bf16.mxu0 0
    %386 = vmatpush1.bf16.msra.mxu0 0
    %387 = vmatprep.subr.bf16.mxu0 0
    %388 = vmatpush1.bf16.msra.mxu0 0
    %389 = vmatprep.subr.bf16.mxu0 0
    %390 = vmatpush1.bf16.msra.mxu0 0
    %391 = vmatprep.subr.bf16.mxu0 0
    %392 = vmatpush1.bf16.msra.mxu0 0
    %393 = vmatprep.subr.bf16.mxu0 0
    %394 = vmatpush1.bf16.msra.mxu0 0
    %395 = vmatprep.subr.bf16.mxu0 0
    %396 = vmatpush1.bf16.msra.mxu0 0
    %397 = vmatprep.subr.bf16.mxu0 0
    %398 = vmatpush1.bf16.msra.mxu0 0
    %399 = vmatprep.subr.bf16.mxu0 0
    %400 = vmatpush1.bf16.msra.mxu0 0
    %401 = vmatprep.subr.bf16.mxu0 0
    %402 = vmatpush1.bf16.msra.mxu0 0
    %403 = vmatprep.subr.bf16.mxu0 0
    %404 = vmatpush1.bf16.msra.mxu0 0
    %405 = vmatprep.subr.bf16.mxu0 0
    %406 = vmatpush1.bf16.msra.mxu0 0
    %407 = vmatprep.subr.bf16.mxu0 0
    %408 = vmatpush1.bf16.msra.mxu0 0
    %409 = vmatprep.subr.bf16.mxu0 0
    %410 = vmatpush1.bf16.msra.mxu0 0
    %411 = vmatprep.subr.bf16.mxu0 0
    %412 = vmatpush1.bf16.msra.mxu0 0
    %413 = vmatprep.subr.bf16.mxu0 0
    %414 = vmatpush1.bf16.msra.mxu0 0
    %415 = vmatprep.mubr.bf16.mxu0 0
    %416 = vmatmul.mubr.bf16.gmra.mrb[0].mxu0 %v381
    %v417 = vpop.f32.mrb[0].mxu0
    %v418 = vadd.f32 0.0, %v417
    %v419 = vpop.f32.mrb[0].mxu0
    %v420 = vpop.f32.mrb[0].mxu0
    %v421 = vadd.f32 0.0, %v420
    %v422 = vpop.f32.mrb[0].mxu0
    %423 = vdwg.mxu0
    %v424 = vadd.f32 %v58, %v418
    %v425 = vadd.f32 %v59, %v421
    %v426 = vpack.c.bf16 %v368, %v365
    %s427 = scalar_lea.vmem %s6, 8
    %v428 = vld [vmem:[%s427] sm:$0xf]
    %v429 = vld [vmem:[%s427 + $0x4] sm:$0xf]
    %v432 = vunpack.c.l.b16 %v428
    %v433 = vunpack.c.l.b16 %v429
    %v434 = vpack.c.b16 %v433, %v432
    %v437 = vsel %vm194, %v426, 0
    %439 = vmatprep.subr.bf16.mxu0 0
    %440 = vmatpush1.bf16.msra.mxu0 %v434
    %441 = vmatprep.subr.bf16.mxu0 0
    %442 = vmatpush1.bf16.msra.mxu0 0
    %443 = vmatprep.subr.bf16.mxu0 0
    %444 = vmatpush1.bf16.msra.mxu0 0
    %445 = vmatprep.subr.bf16.mxu0 0
    %446 = vmatpush1.bf16.msra.mxu0 0
    %447 = vmatprep.subr.bf16.mxu0 0
    %448 = vmatpush1.bf16.msra.mxu0 0
    %449 = vmatprep.subr.bf16.mxu0 0
    %450 = vmatpush1.bf16.msra.mxu0 0
    %451 = vmatprep.subr.bf16.mxu0 0
    %452 = vmatpush1.bf16.msra.mxu0 0
    %453 = vmatprep.subr.bf16.mxu0 0
    %454 = vmatpush1.bf16.msra.mxu0 0
    %455 = vmatprep.subr.bf16.mxu0 0
    %456 = vmatpush1.bf16.msra.mxu0 0
    %457 = vmatprep.subr.bf16.mxu0 0
    %458 = vmatpush1.bf16.msra.mxu0 0
    %459 = vmatprep.subr.bf16.mxu0 0
    %460 = vmatpush1.bf16.msra.mxu0 0
    %461 = vmatprep.subr.bf16.mxu0 0
    %462 = vmatpush1.bf16.msra.mxu0 0
    %463 = vmatprep.subr.bf16.mxu0 0
    %464 = vmatpush1.bf16.msra.mxu0 0
    %465 = vmatprep.subr.bf16.mxu0 0
    %466 = vmatpush1.bf16.msra.mxu0 0
    %467 = vmatprep.subr.bf16.mxu0 0
    %468 = vmatpush1.bf16.msra.mxu0 0
    %469 = vmatprep.subr.bf16.mxu0 0
    %470 = vmatpush1.bf16.msra.mxu0 0
    %471 = vmatprep.mubr.bf16.mxu0 0
    %472 = vmatmul.mubr.bf16.gmra.mrb[0].mxu0 %v437
    %v473 = vpop.f32.mrb[0].mxu0
    %v474 = vadd.f32 0.0, %v473
    %v475 = vpop.f32.mrb[0].mxu0
    %v476 = vpop.f32.mrb[0].mxu0
    %v477 = vadd.f32 0.0, %v476
    %v478 = vpop.f32.mrb[0].mxu0
    %479 = vdwg.mxu0
    %v480 = vadd.f32 %v424, %v474
    %v481 = vadd.f32 %v425, %v477
    %v482 = vld [vmem:[%s7] sm:$0x1]
    %v484 = vlaneseq
    %v485 = vshrl.u32 %v484, 7
    %v486 = vsub.s32 0, %v485
    %v487 = vrot.slane %v482, %v486
    %v489 = vadd.f32 %v480, %v487
    %v490 = vadd.f32 %v481, %v487
    %v491 = vld [vmem:[%s8] sm:$0x1]
    %v492 = vld [vmem:[%s9] sm:$0x1]
    %v493 = vsel %vm66, %v489, 0.0
    %494 = vadd.xlane.f32.xlu0 %v493
    %v495 = vpop.xlane.xlu0 %494
    %v496 = vsel %vm66, %v490, 0.0
    %497 = vadd.xlane.f32.xlu0 %v496
    %v498 = vpop.xlane.xlu0 %497
    %v499 = vmul.f32 %v495, %v73
    %v500 = vmul.f32 %v498, %v73
    %v501 = vsub.f32 %v489, %v499
    %v502 = vsub.f32 %v490, %v500
    %v503 = vmul.f32 %v501, %v501
    %v504 = vmul.f32 %v502, %v502
    %v505 = vsel %vm66, %v503, 0.0
    %506 = vadd.xlane.f32.xlu0 %v505
    %v507 = vpop.xlane.xlu0 %506
    %v508 = vsel %vm66, %v504, 0.0
    %509 = vadd.xlane.f32.xlu0 %v508
    %v510 = vpop.xlane.xlu0 %509
    %v511 = vmul.f32 %v507, %v73
    %v512 = vmul.f32 %v510, %v73
    %v513 = vadd.f32 %v511, 1e-05
    %v514 = vadd.f32 %v512, 1e-05
    %v515 = vrsqrt.pop %v513
    %v516 = vrsqrt.pop %v514
    %v517 = vmul.f32 %v501, %v515
    %v518 = vmul.f32 %v502, %v516
    %v520 = vlaneseq
    %v521 = vshrl.u32 %v520, 7
    %v522 = vsub.s32 0, %v521
    %v523 = vrot.slane %v491, %v522
    %v525 = vmul.f32 %v517, %v523
    %v526 = vmul.f32 %v518, %v523
    %v528 = vlaneseq
    %v529 = vshrl.u32 %v528, 7
    %v530 = vsub.s32 0, %v529
    %v531 = vrot.slane %v492, %v530
    %v533 = vadd.f32 %v525, %v531
    %v534 = vadd.f32 %v526, %v531
    %v535 = vpack.c.bf16 %v534, %v533
    %v536 = vld [vmem:[%s10] sm:$0xf]
    %v537 = vld [vmem:[%s10 + $0x4] sm:$0xf]
    %v538 = vld [vmem:[%s10 + $0x8] sm:$0xf]
    %v539 = vld [vmem:[%s10 + $0xc] sm:$0xf]
    %v540 = vld [vmem:[%s11] sm:$0x1]
    %v542 = vlaneseq
    %v543 = vshrl.u32 %v542, 7
    %v544 = vsub.s32 0, %v543
    %v545 = vrot.slane %v540, %v544
    %v551 = vunpack.c.l.b16 %v536
    %v552 = vunpack.c.l.b16 %v537
    %v553 = vunpack.c.l.b16 %v538
    %v554 = vunpack.c.l.b16 %v539
    %v555 = vpack.c.b16 %v552, %v551
    %v556 = vpack.c.b16 %v554, %v553
    %v560 = vsel %vm66, %v535, 0
    %562 = vmatprep.subr.bf16.mxu0 0
    %563 = vmatpush1.bf16.msra.mxu0 %v555
    %564 = vmatprep.subr.bf16.mxu0 0
    %565 = vmatpush1.bf16.msra.mxu0 %v556
    %566 = vmatprep.subr.bf16.mxu0 0
    %567 = vmatpush1.bf16.msra.mxu0 0
    %568 = vmatprep.subr.bf16.mxu0 0
    %569 = vmatpush1.bf16.msra.mxu0 0
    %570 = vmatprep.subr.bf16.mxu0 0
    %571 = vmatpush1.bf16.msra.mxu0 0
    %572 = vmatprep.subr.bf16.mxu0 0
    %573 = vmatpush1.bf16.msra.mxu0 0
    %574 = vmatprep.subr.bf16.mxu0 0
    %575 = vmatpush1.bf16.msra.mxu0 0
    %576 = vmatprep.subr.bf16.mxu0 0
    %577 = vmatpush1.bf16.msra.mxu0 0
    %578 = vmatprep.subr.bf16.mxu0 0
    %579 = vmatpush1.bf16.msra.mxu0 0
    %580 = vmatprep.subr.bf16.mxu0 0
    %581 = vmatpush1.bf16.msra.mxu0 0
    %582 = vmatprep.subr.bf16.mxu0 0
    %583 = vmatpush1.bf16.msra.mxu0 0
    %584 = vmatprep.subr.bf16.mxu0 0
    %585 = vmatpush1.bf16.msra.mxu0 0
    %586 = vmatprep.subr.bf16.mxu0 0
    %587 = vmatpush1.bf16.msra.mxu0 0
    %588 = vmatprep.subr.bf16.mxu0 0
    %589 = vmatpush1.bf16.msra.mxu0 0
    %590 = vmatprep.subr.bf16.mxu0 0
    %591 = vmatpush1.bf16.msra.mxu0 0
    %592 = vmatprep.subr.bf16.mxu0 0
    %593 = vmatpush1.bf16.msra.mxu0 0
    %594 = vmatprep.mubr.bf16.mxu0 0
    %595 = vmatmul.mubr.bf16.gmra.mrb[0].mxu0 %v560
    %v596 = vpop.f32.mrb[0].mxu0
    %v597 = vadd.f32 %v545, %v596
    %v598 = vpop.f32.mrb[0].mxu0
    %v599 = vpop.f32.mrb[0].mxu0
    %v600 = vadd.f32 %v545, %v599
    %v601 = vpop.f32.mrb[0].mxu0
    %602 = vdwg.mxu0
    %v603 = vmul.f32 %v597, 0.5
    %v604 = vmul.f32 %v600, 0.5
    %v605 = vmul.f32 %v597, 0.044715
    %v606 = vmul.f32 %v600, 0.044715
    %v607 = vmul.f32 %v605, %v597
    %v608 = vmul.f32 %v606, %v600
    %v609 = vmul.f32 %v607, %v597
    %v610 = vmul.f32 %v608, %v600
    %v611 = vadd.f32 %v597, %v609
    %v612 = vadd.f32 %v600, %v610
    %v613 = vmul.f32 %v611, 0.7978846
    %v614 = vmul.f32 %v612, 0.7978846
    %v615 = vtanh.pop %v613
    %v616 = vtanh.pop %v614
    %v617 = vadd.f32 %v615, 1.0
    %v618 = vadd.f32 %v616, 1.0
    %v619 = vmul.f32 %v603, %v617
    %v620 = vmul.f32 %v604, %v618
    %v621 = vpack.c.bf16 %v620, %v619
    %v622 = vld [vmem:[%s12] sm:$0xf]
    %v623 = vld [vmem:[%s12 + $0x4] sm:$0xf]
    %v624 = vld [vmem:[%s12 + $0x8] sm:$0xf]
    %v625 = vld [vmem:[%s12 + $0xc] sm:$0xf]
    %v626 = vld [vmem:[%s12 + $0x10] sm:$0xf]
    %v627 = vld [vmem:[%s12 + $0x14] sm:$0xf]
    %v628 = vld [vmem:[%s12 + $0x18] sm:$0xf]
    %v629 = vld [vmem:[%s12 + $0x1c] sm:$0xf]
    %v630 = vld [vmem:[%s12 + $0x20] sm:$0xf]
    %v631 = vld [vmem:[%s12 + $0x24] sm:$0xf]
    %v632 = vld [vmem:[%s12 + $0x28] sm:$0xf]
    %v633 = vld [vmem:[%s12 + $0x2c] sm:$0xf]
    %v634 = vld [vmem:[%s12 + $0x30] sm:$0xf]
    %v635 = vld [vmem:[%s12 + $0x34] sm:$0xf]
    %v636 = vld [vmem:[%s12 + $0x38] sm:$0xf]
    %v637 = vld [vmem:[%s12 + $0x3c] sm:$0xf]
    %v638 = vld [vmem:[%s13] sm:$0x1]
    %v640 = vlaneseq
    %v641 = vshrl.u32 %v640, 7
    %v642 = vsub.s32 0, %v641
    %v643 = vrot.slane %v638, %v642
    %v661 = vunpack.c.l.b16 %v622
    %v662 = vunpack.c.l.b16 %v623
    %v663 = vunpack.c.l.b16 %v624
    %v664 = vunpack.c.l.b16 %v625
    %v665 = vunpack.c.l.b16 %v626
    %v666 = vunpack.c.l.b16 %v627
    %v667 = vunpack.c.l.b16 %v628
    %v668 = vunpack.c.l.b16 %v629
    %v669 = vunpack.c.l.b16 %v630
    %v670 = vunpack.c.l.b16 %v631
    %v671 = vunpack.c.l.b16 %v632
    %v672 = vunpack.c.l.b16 %v633
    %v673 = vunpack.c.l.b16 %v634
    %v674 = vunpack.c.l.b16 %v635
    %v675 = vunpack.c.l.b16 %v636
    %v676 = vunpack.c.l.b16 %v637
    %v677 = vpack.c.b16 %v662, %v661
    %v678 = vpack.c.b16 %v664, %v663
    %v679 = vpack.c.b16 %v666, %v665
    %v680 = vpack.c.b16 %v668, %v667
    %v681 = vpack.c.b16 %v670, %v669
    %v682 = vpack.c.b16 %v672, %v671
    %v683 = vpack.c.b16 %v674, %v673
    %v684 = vpack.c.b16 %v676, %v675
    %693 = vmatprep.subr.bf16.mxu0 0
    %694 = vmatpush1.bf16.msra.mxu0 %v677
    %695 = vmatprep.subr.bf16.mxu0 0
    %696 = vmatpush1.bf16.msra.mxu0 %v678
    %697 = vmatprep.subr.bf16.mxu0 0
    %698 = vmatpush1.bf16.msra.mxu0 %v679
    %699 = vmatprep.subr.bf16.mxu0 0
    %700 = vmatpush1.bf16.msra.mxu0 %v680
    %701 = vmatprep.subr.bf16.mxu0 0
    %702 = vmatpush1.bf16.msra.mxu0 %v681
    %703 = vmatprep.subr.bf16.mxu0 0
    %704 = vmatpush1.bf16.msra.mxu0 %v682
    %705 = vmatprep.subr.bf16.mxu0 0
    %706 = vmatpush1.bf16.msra.mxu0 %v683
    %707 = vmatprep.subr.bf16.mxu0 0
    %708 = vmatpush1.bf16.msra.mxu0 %v684
    %709 = vmatprep.subr.bf16.mxu0 0
    %710 = vmatpush1.bf16.msra.mxu0 0
    %711 = vmatprep.subr.bf16.mxu0 0
    %712 = vmatpush1.bf16.msra.mxu0 0
    %713 = vmatprep.subr.bf16.mxu0 0
    %714 = vmatpush1.bf16.msra.mxu0 0
    %715 = vmatprep.subr.bf16.mxu0 0
    %716 = vmatpush1.bf16.msra.mxu0 0
    %717 = vmatprep.subr.bf16.mxu0 0
    %718 = vmatpush1.bf16.msra.mxu0 0
    %719 = vmatprep.subr.bf16.mxu0 0
    %720 = vmatpush1.bf16.msra.mxu0 0
    %721 = vmatprep.subr.bf16.mxu0 0
    %722 = vmatpush1.bf16.msra.mxu0 0
    %723 = vmatprep.subr.bf16.mxu0 0
    %724 = vmatpush1.bf16.msra.mxu0 0
    %725 = vmatprep.mubr.bf16.mxu0 0
    %726 = vmatmul.mubr.bf16.gmra.mrb[0].mxu0 %v621
    %v727 = vpop.f32.mrb[0].mxu0
    %v728 = vadd.f32 %v643, %v727
    %v729 = vpop.f32.mrb[0].mxu0
    %v730 = vpop.f32.mrb[0].mxu0
    %v731 = vadd.f32 %v643, %v730
    %v732 = vpop.f32.mrb[0].mxu0
    %733 = vdwg.mxu0
    %v734 = vadd.f32 %v489, %v728
    %v735 = vadd.f32 %v490, %v731
    %s736 = scalar_lea.vmem %s2, 1
    %v737 = vld [vmem:[%s736] sm:$0x1]
    %s738 = scalar_lea.vmem %s3, 1
    %v739 = vld [vmem:[%s738] sm:$0x1]
    %v740 = vsel %vm66, %v734, 0.0
    %741 = vadd.xlane.f32.xlu0 %v740
    %v742 = vpop.xlane.xlu0 %741
    %v743 = vsel %vm66, %v735, 0.0
    %744 = vadd.xlane.f32.xlu0 %v743
    %v745 = vpop.xlane.xlu0 %744
    %v746 = vmul.f32 %v742, %v73
    %v747 = vmul.f32 %v745, %v73
    %v748 = vsub.f32 %v734, %v746
    %v749 = vsub.f32 %v735, %v747
    %v750 = vmul.f32 %v748, %v748
    %v751 = vmul.f32 %v749, %v749
    %v752 = vsel %vm66, %v750, 0.0
    %753 = vadd.xlane.f32.xlu0 %v752
    %v754 = vpop.xlane.xlu0 %753
    %v755 = vsel %vm66, %v751, 0.0
    %756 = vadd.xlane.f32.xlu0 %v755
    %v757 = vpop.xlane.xlu0 %756
    %v758 = vmul.f32 %v754, %v73
    %v759 = vmul.f32 %v757, %v73
    %v760 = vadd.f32 %v758, 1e-05
    %v761 = vadd.f32 %v759, 1e-05
    %v762 = vrsqrt.pop %v760
    %v763 = vrsqrt.pop %v761
    %v764 = vmul.f32 %v748, %v762
    %v765 = vmul.f32 %v749, %v763
    %v767 = vlaneseq
    %v768 = vshrl.u32 %v767, 7
    %v769 = vsub.s32 0, %v768
    %v770 = vrot.slane %v737, %v769
    %v772 = vmul.f32 %v764, %v770
    %v773 = vmul.f32 %v765, %v770
    %v775 = vlaneseq
    %v776 = vshrl.u32 %v775, 7
    %v777 = vsub.s32 0, %v776
    %v778 = vrot.slane %v739, %v777
    %v780 = vadd.f32 %v772, %v778
    %v781 = vadd.f32 %v773, %v778
    %v782 = vpack.c.bf16 %v781, %v780
    %s783 = scalar_lea.vmem %s4, 16
    %v784 = vld [vmem:[%s783] sm:$0xf]
    %v785 = vld [vmem:[%s783 + $0x4] sm:$0xf]
    %v786 = vld [vmem:[%s783 + $0x8] sm:$0xf]
    %v787 = vld [vmem:[%s783 + $0xc] sm:$0xf]
    %s788 = scalar_lea.vmem %s5, 1
    %v789 = vld [vmem:[%s788] sm:$0x1]
    %v791 = vlaneseq
    %v792 = vshrl.u32 %v791, 7
    %v793 = vsub.s32 0, %v792
    %v794 = vrot.slane %v789, %v793
    %v800 = vunpack.c.l.b16 %v784
    %v801 = vunpack.c.l.b16 %v785
    %v802 = vunpack.c.l.b16 %v786
    %v803 = vunpack.c.l.b16 %v787
    %v804 = vpack.c.b16 %v801, %v800
    %v805 = vpack.c.b16 %v803, %v802
    %v809 = vsel %vm66, %v782, 0
    %811 = vmatprep.subr.bf16.mxu0 0
    %812 = vmatpush1.bf16.msra.mxu0 %v804
    %813 = vmatprep.subr.bf16.mxu0 0
    %814 = vmatpush1.bf16.msra.mxu0 %v805
    %815 = vmatprep.subr.bf16.mxu0 0
    %816 = vmatpush1.bf16.msra.mxu0 0
    %817 = vmatprep.subr.bf16.mxu0 0
    %818 = vmatpush1.bf16.msra.mxu0 0
    %819 = vmatprep.subr.bf16.mxu0 0
    %820 = vmatpush1.bf16.msra.mxu0 0
    %821 = vmatprep.subr.bf16.mxu0 0
    %822 = vmatpush1.bf16.msra.mxu0 0
    %823 = vmatprep.subr.bf16.mxu0 0
    %824 = vmatpush1.bf16.msra.mxu0 0
    %825 = vmatprep.subr.bf16.mxu0 0
    %826 = vmatpush1.bf16.msra.mxu0 0
    %827 = vmatprep.subr.bf16.mxu0 0
    %828 = vmatpush1.bf16.msra.mxu0 0
    %829 = vmatprep.subr.bf16.mxu0 0
    %830 = vmatpush1.bf16.msra.mxu0 0
    %831 = vmatprep.subr.bf16.mxu0 0
    %832 = vmatpush1.bf16.msra.mxu0 0
    %833 = vmatprep.subr.bf16.mxu0 0
    %834 = vmatpush1.bf16.msra.mxu0 0
    %835 = vmatprep.subr.bf16.mxu0 0
    %836 = vmatpush1.bf16.msra.mxu0 0
    %837 = vmatprep.subr.bf16.mxu0 0
    %838 = vmatpush1.bf16.msra.mxu0 0
    %839 = vmatprep.subr.bf16.mxu0 0
    %840 = vmatpush1.bf16.msra.mxu0 0
    %841 = vmatprep.subr.bf16.mxu0 0
    %842 = vmatpush1.bf16.msra.mxu0 0
    %843 = vmatprep.mubr.bf16.mxu0 0
    %844 = vmatmul.mubr.bf16.gmra.mrb[0].mxu0 %v809
    %v845 = vpop.f32.mrb[0].mxu0
    %v846 = vadd.f32 %v794, %v845
    %v847 = vpop.f32.mrb[0].mxu0
    %v848 = vpop.f32.mrb[0].mxu0
    %v849 = vadd.f32 %v794, %v848
    %v850 = vpop.f32.mrb[0].mxu0
    %851 = vdwg.mxu0
    %854 = vrot.lane.b32.xlu0 %v846, 112
    %v855 = vpop.permute.xlu0 %854
    %856 = vrot.lane.b32.xlu0 %v849, 112
    %v857 = vpop.permute.xlu0 %856
    %v860 = vpack.c.bf16 %v849, %v846
    %v861 = vpack.c.bf16 %v857, %v855
    %864 = vrot.lane.b32.xlu0 %v860, 96
    %v865 = vpop.permute.xlu0 %864
    %866 = vrot.lane.b32.xlu0 %v861, 96
    %v867 = vpop.permute.xlu0 %866
    %v869 = vsel %vm194, %v860, 0
    %v872 = vsel %vm194, %v861, 0
    %v875 = vsel %vm194, %v865, 0
    %v878 = vsel %vm194, %v867, 0
    %880 = vmatprep.subr.bf16.mxu0 0
    %881 = vmatpush1.bf16.xpose.msra.mxu0 %v875
    %882 = vmatprep.subr.bf16.mxu0 0
    %883 = vmatpush1.bf16.xpose.msra.mxu0 %v878
    %884 = vmatprep.subr.bf16.mxu0 0
    %885 = vmatpush1.bf16.xpose.msra.mxu0 0
    %886 = vmatprep.subr.bf16.mxu0 0
    %887 = vmatpush1.bf16.xpose.msra.mxu0 0
    %888 = vmatprep.subr.bf16.mxu0 0
    %889 = vmatpush1.bf16.xpose.msra.mxu0 0
    %890 = vmatprep.subr.bf16.mxu0 0
    %891 = vmatpush1.bf16.xpose.msra.mxu0 0
    %892 = vmatprep.subr.bf16.mxu0 0
    %893 = vmatpush1.bf16.xpose.msra.mxu0 0
    %894 = vmatprep.subr.bf16.mxu0 0
    %895 = vmatpush1.bf16.xpose.msra.mxu0 0
    %896 = vmatprep.subr.bf16.mxu0 0
    %897 = vmatpush1.bf16.xpose.msra.mxu0 0
    %898 = vmatprep.subr.bf16.mxu0 0
    %899 = vmatpush1.bf16.xpose.msra.mxu0 0
    %900 = vmatprep.subr.bf16.mxu0 0
    %901 = vmatpush1.bf16.xpose.msra.mxu0 0
    %902 = vmatprep.subr.bf16.mxu0 0
    %903 = vmatpush1.bf16.xpose.msra.mxu0 0
    %904 = vmatprep.subr.bf16.mxu0 0
    %905 = vmatpush1.bf16.xpose.msra.mxu0 0
    %906 = vmatprep.subr.bf16.mxu0 0
    %907 = vmatpush1.bf16.xpose.msra.mxu0 0
    %908 = vmatprep.subr.bf16.mxu0 0
    %909 = vmatpush1.bf16.xpose.msra.mxu0 0
    %910 = vmatprep.subr.bf16.mxu0 0
    %911 = vmatpush1.bf16.xpose.msra.mxu0 0
    %912 = vmatprep.mubr.bf16.mxu0 0
    %913 = vmatmul.mubr.bf16.gmra.mrb[0].mxu0 %v869
    %v914 = vpop.f32.mrb[0].mxu0
    %v915 = vadd.f32 0.0, %v914
    %v916 = vpop.f32.mrb[0].mxu0
    %v917 = vpop.f32.mrb[0].mxu0
    %v918 = vadd.f32 0.0, %v917
    %v919 = vpop.f32.mrb[0].mxu0
    %920 = vmatprep.mubr.bf16.mxu0 0
    %921 = vmatmul.mubr.bf16.gmra.mrb[0].mxu0 %v872
    %v922 = vpop.f32.mrb[0].mxu0
    %v923 = vadd.f32 0.0, %v922
    %v924 = vpop.f32.mrb[0].mxu0
    %v925 = vpop.f32.mrb[0].mxu0
    %v926 = vadd.f32 0.0, %v925
    %v927 = vpop.f32.mrb[0].mxu0
    %928 = vdwg.mxu0
    %v929 = vmul.f32 %v915, 0.25
    %v930 = vmul.f32 %v918, 0.25
    %v931 = vmul.f32 %v923, 0.25
    %v932 = vmul.f32 %v926, 0.25
    %v933 = vadd.f32 %v929, %v60
    %v934 = vadd.f32 %v930, %v61
    %v935 = vadd.f32 %v931, %v62
    %v936 = vadd.f32 %v932, %v63
    %v937 = vsel %vm66, %v933, -inf
    %938 = vmax.xlane.f32.xlu0 %v937
    %v939 = vpop.xlane.xlu0 %938
    %v940 = vsel %vm66, %v934, -inf
    %941 = vmax.xlane.f32.xlu0 %v940
    %v942 = vpop.xlane.xlu0 %941
    %v943 = vsel %vm66, %v935, -inf
    %944 = vmax.xlane.f32.xlu0 %v943
    %v945 = vpop.xlane.xlu0 %944
    %v946 = vsel %vm66, %v936, -inf
    %947 = vmax.xlane.f32.xlu0 %v946
    %v948 = vpop.xlane.xlu0 %947
    %v949 = vsub.f32 %v933, %v939
    %v950 = vsub.f32 %v934, %v942
    %v951 = vsub.f32 %v935, %v945
    %v952 = vsub.f32 %v936, %v948
    %v953 = vmul.f32 %v949, 1.442695
    %v954 = vpow.pop %v953
    %v955 = vmul.f32 %v950, 1.442695
    %v956 = vpow.pop %v955
    %v957 = vmul.f32 %v951, 1.442695
    %v958 = vpow.pop %v957
    %v959 = vmul.f32 %v952, 1.442695
    %v960 = vpow.pop %v959
    %v961 = vsel %vm66, %v954, 0.0
    %962 = vadd.xlane.f32.xlu0 %v961
    %v963 = vpop.xlane.xlu0 %962
    %v964 = vsel %vm66, %v956, 0.0
    %965 = vadd.xlane.f32.xlu0 %v964
    %v966 = vpop.xlane.xlu0 %965
    %v967 = vsel %vm66, %v958, 0.0
    %968 = vadd.xlane.f32.xlu0 %v967
    %v969 = vpop.xlane.xlu0 %968
    %v970 = vsel %vm66, %v960, 0.0
    %971 = vadd.xlane.f32.xlu0 %v970
    %v972 = vpop.xlane.xlu0 %971
    %v973 = vrcp.pop %v963
    %v974 = vrcp.pop %v966
    %v975 = vrcp.pop %v969
    %v976 = vrcp.pop %v972
    %v977 = vmul.f32 %v954, %v973
    %v978 = vmul.f32 %v956, %v974
    %v979 = vmul.f32 %v958, %v975
    %v980 = vmul.f32 %v960, %v976
    %v981 = vpack.c.bf16 %v978, %v977
    %v982 = vpack.c.bf16 %v980, %v979
    %983 = vrot.lane.b32.xlu0 %v860, 64
    %v984 = vpop.permute.xlu0 %983
    %985 = vrot.lane.b32.xlu0 %v861, 64
    %v986 = vpop.permute.xlu0 %985
    %v990 = vsel %vm66, %v981, 0
    %v993 = vsel %vm66, %v982, 0
    %995 = vmatprep.subr.bf16.mxu0 0
    %996 = vmatpush1.bf16.msra.mxu0 %v984
    %997 = vmatprep.subr.bf16.mxu0 0
    %998 = vmatpush1.bf16.msra.mxu0 %v986
    %999 = vmatprep.subr.bf16.mxu0 0
    %1000 = vmatpush1.bf16.msra.mxu0 0
    %1001 = vmatprep.subr.bf16.mxu0 0
    %1002 = vmatpush1.bf16.msra.mxu0 0
    %1003 = vmatprep.subr.bf16.mxu0 0
    %1004 = vmatpush1.bf16.msra.mxu0 0
    %1005 = vmatprep.subr.bf16.mxu0 0
    %1006 = vmatpush1.bf16.msra.mxu0 0
    %1007 = vmatprep.subr.bf16.mxu0 0
    %1008 = vmatpush1.bf16.msra.mxu0 0
    %1009 = vmatprep.subr.bf16.mxu0 0
    %1010 = vmatpush1.bf16.msra.mxu0 0
    %1011 = vmatprep.subr.bf16.mxu0 0
    %1012 = vmatpush1.bf16.msra.mxu0 0
    %1013 = vmatprep.subr.bf16.mxu0 0
    %1014 = vmatpush1.bf16.msra.mxu0 0
    %1015 = vmatprep.subr.bf16.mxu0 0
    %1016 = vmatpush1.bf16.msra.mxu0 0
    %1017 = vmatprep.subr.bf16.mxu0 0
    %1018 = vmatpush1.bf16.msra.mxu0 0
    %1019 = vmatprep.subr.bf16.mxu0 0
    %1020 = vmatpush1.bf16.msra.mxu0 0
    %1021 = vmatprep.subr.bf16.mxu0 0
    %1022 = vmatpush1.bf16.msra.mxu0 0
    %1023 = vmatprep.subr.bf16.mxu0 0
    %1024 = vmatpush1.bf16.msra.mxu0 0
    %1025 = vmatprep.subr.bf16.mxu0 0
    %1026 = vmatpush1.bf16.msra.mxu0 0
    %1027 = vmatprep.mubr.bf16.mxu0 0
    %1028 = vmatmul.mubr.bf16.gmra.mrb[0].mxu0 %v990
    %v1029 = vpop.f32.mrb[0].mxu0
    %v1030 = vadd.f32 0.0, %v1029
    %v1031 = vpop.f32.mrb[0].mxu0
    %v1032 = vpop.f32.mrb[0].mxu0
    %v1033 = vadd.f32 0.0, %v1032
    %v1034 = vpop.f32.mrb[0].mxu0
    %1035 = vmatprep.mubr.bf16.mxu0 0
    %1036 = vmatmul.mubr.bf16.gmra.mrb[0].mxu0 %v993
    %v1037 = vpop.f32.mrb[0].mxu0
    %v1038 = vadd.f32 0.0, %v1037
    %v1039 = vpop.f32.mrb[0].mxu0
    %v1040 = vpop.f32.mrb[0].mxu0
    %v1041 = vadd.f32 0.0, %v1040
    %v1042 = vpop.f32.mrb[0].mxu0
    %1043 = vdwg.mxu0
    %v1044 = vpack.c.bf16 %v1033, %v1030
    %s1045 = scalar_lea.vmem %s6, 16
    %v1046 = vld [vmem:[%s1045] sm:$0xf]
    %v1047 = vld [vmem:[%s1045 + $0x4] sm:$0xf]
    %v1050 = vunpack.c.l.b16 %v1046
    %v1051 = vunpack.c.l.b16 %v1047
    %v1052 = vpack.c.b16 %v1051, %v1050
    %v1055 = vsel %vm194, %v1044, 0
    %1057 = vmatprep.subr.bf16.mxu0 0
    %1058 = vmatpush1.bf16.msra.mxu0 %v1052
    %1059 = vmatprep.subr.bf16.mxu0 0
    %1060 = vmatpush1.bf16.msra.mxu0 0
    %1061 = vmatprep.subr.bf16.mxu0 0
    %1062 = vmatpush1.bf16.msra.mxu0 0
    %1063 = vmatprep.subr.bf16.mxu0 0
    %1064 = vmatpush1.bf16.msra.mxu0 0
    %1065 = vmatprep.subr.bf16.mxu0 0
    %1066 = vmatpush1.bf16.msra.mxu0 0
    %1067 = vmatprep.subr.bf16.mxu0 0
    %1068 = vmatpush1.bf16.msra.mxu0 0
    %1069 = vmatprep.subr.bf16.mxu0 0
    %1070 = vmatpush1.bf16.msra.mxu0 0
    %1071 = vmatprep.subr.bf16.mxu0 0
    %1072 = vmatpush1.bf16.msra.mxu0 0
    %1073 = vmatprep.subr.bf16.mxu0 0
    %1074 = vmatpush1.bf16.msra.mxu0 0
    %1075 = vmatprep.subr.bf16.mxu0 0
    %1076 = vmatpush1.bf16.msra.mxu0 0
    %1077 = vmatprep.subr.bf16.mxu0 0
    %1078 = vmatpush1.bf16.msra.mxu0 0
    %1079 = vmatprep.subr.bf16.mxu0 0
    %1080 = vmatpush1.bf16.msra.mxu0 0
    %1081 = vmatprep.subr.bf16.mxu0 0
    %1082 = vmatpush1.bf16.msra.mxu0 0
    %1083 = vmatprep.subr.bf16.mxu0 0
    %1084 = vmatpush1.bf16.msra.mxu0 0
    %1085 = vmatprep.subr.bf16.mxu0 0
    %1086 = vmatpush1.bf16.msra.mxu0 0
    %1087 = vmatprep.subr.bf16.mxu0 0
    %1088 = vmatpush1.bf16.msra.mxu0 0
    %1089 = vmatprep.mubr.bf16.mxu0 0
    %1090 = vmatmul.mubr.bf16.gmra.mrb[0].mxu0 %v1055
    %v1091 = vpop.f32.mrb[0].mxu0
    %v1092 = vadd.f32 0.0, %v1091
    %v1093 = vpop.f32.mrb[0].mxu0
    %v1094 = vpop.f32.mrb[0].mxu0
    %v1095 = vadd.f32 0.0, %v1094
    %v1096 = vpop.f32.mrb[0].mxu0
    %1097 = vdwg.mxu0
    %v1098 = vadd.f32 %v734, %v1092
    %v1099 = vadd.f32 %v735, %v1095
    %v1100 = vpack.c.bf16 %v1041, %v1038
    %s1101 = scalar_lea.vmem %s6, 24
    %v1102 = vld [vmem:[%s1101] sm:$0xf]
    %v1103 = vld [vmem:[%s1101 + $0x4] sm:$0xf]
    %v1106 = vunpack.c.l.b16 %v1102
    %v1107 = vunpack.c.l.b16 %v1103
    %v1108 = vpack.c.b16 %v1107, %v1106
    %v1111 = vsel %vm194, %v1100, 0
    %1113 = vmatprep.subr.bf16.mxu0 0
    %1114 = vmatpush1.bf16.msra.mxu0 %v1108
    %1115 = vmatprep.subr.bf16.mxu0 0
    %1116 = vmatpush1.bf16.msra.mxu0 0
    %1117 = vmatprep.subr.bf16.mxu0 0
    %1118 = vmatpush1.bf16.msra.mxu0 0
    %1119 = vmatprep.subr.bf16.mxu0 0
    %1120 = vmatpush1.bf16.msra.mxu0 0
    %1121 = vmatprep.subr.bf16.mxu0 0
    %1122 = vmatpush1.bf16.msra.mxu0 0
    %1123 = vmatprep.subr.bf16.mxu0 0
    %1124 = vmatpush1.bf16.msra.mxu0 0
    %1125 = vmatprep.subr.bf16.mxu0 0
    %1126 = vmatpush1.bf16.msra.mxu0 0
    %1127 = vmatprep.subr.bf16.mxu0 0
    %1128 = vmatpush1.bf16.msra.mxu0 0
    %1129 = vmatprep.subr.bf16.mxu0 0
    %1130 = vmatpush1.bf16.msra.mxu0 0
    %1131 = vmatprep.subr.bf16.mxu0 0
    %1132 = vmatpush1.bf16.msra.mxu0 0
    %1133 = vmatprep.subr.bf16.mxu0 0
    %1134 = vmatpush1.bf16.msra.mxu0 0
    %1135 = vmatprep.subr.bf16.mxu0 0
    %1136 = vmatpush1.bf16.msra.mxu0 0
    %1137 = vmatprep.subr.bf16.mxu0 0
    %1138 = vmatpush1.bf16.msra.mxu0 0
    %1139 = vmatprep.subr.bf16.mxu0 0
    %1140 = vmatpush1.bf16.msra.mxu0 0
    %1141 = vmatprep.subr.bf16.mxu0 0
    %1142 = vmatpush1.bf16.msra.mxu0 0
    %1143 = vmatprep.subr.bf16.mxu0 0
    %1144 = vmatpush1.bf16.msra.mxu0 0
    %1145 = vmatprep.mubr.bf16.mxu0 0
    %1146 = vmatmul.mubr.bf16.gmra.mrb[0].mxu0 %v1111
    %v1147 = vpop.f32.mrb[0].mxu0
    %v1148 = vadd.f32 0.0, %v1147
    %v1149 = vpop.f32.mrb[0].mxu0
    %v1150 = vpop.f32.mrb[0].mxu0
    %v1151 = vadd.f32 0.0, %v1150
    %v1152 = vpop.f32.mrb[0].mxu0
    %1153 = vdwg.mxu0
    %v1154 = vadd.f32 %v1098, %v1148
    %v1155 = vadd.f32 %v1099, %v1151
    %s1156 = scalar_lea.vmem %s7, 1
    %v1157 = vld [vmem:[%s1156] sm:$0x1]
    %v1159 = vlaneseq
    %v1160 = vshrl.u32 %v1159, 7
    %v1161 = vsub.s32 0, %v1160
    %v1162 = vrot.slane %v1157, %v1161
    %v1164 = vadd.f32 %v1154, %v1162
    %v1165 = vadd.f32 %v1155, %v1162
    %s1166 = scalar_lea.vmem %s8, 1
    %v1167 = vld [vmem:[%s1166] sm:$0x1]
    %s1168 = scalar_lea.vmem %s9, 1
    %v1169 = vld [vmem:[%s1168] sm:$0x1]
    %v1170 = vsel %vm66, %v1164, 0.0
    %1171 = vadd.xlane.f32.xlu0 %v1170
    %v1172 = vpop.xlane.xlu0 %1171
    %v1173 = vsel %vm66, %v1165, 0.0
    %1174 = vadd.xlane.f32.xlu0 %v1173
    %v1175 = vpop.xlane.xlu0 %1174
    %v1176 = vmul.f32 %v1172, %v73
    %v1177 = vmul.f32 %v1175, %v73
    %v1178 = vsub.f32 %v1164, %v1176
    %v1179 = vsub.f32 %v1165, %v1177
    %v1180 = vmul.f32 %v1178, %v1178
    %v1181 = vmul.f32 %v1179, %v1179
    %v1182 = vsel %vm66, %v1180, 0.0
    %1183 = vadd.xlane.f32.xlu0 %v1182
    %v1184 = vpop.xlane.xlu0 %1183
    %v1185 = vsel %vm66, %v1181, 0.0
    %1186 = vadd.xlane.f32.xlu0 %v1185
    %v1187 = vpop.xlane.xlu0 %1186
    %v1188 = vmul.f32 %v1184, %v73
    %v1189 = vmul.f32 %v1187, %v73
    %v1190 = vadd.f32 %v1188, 1e-05
    %v1191 = vadd.f32 %v1189, 1e-05
    %v1192 = vrsqrt.pop %v1190
    %v1193 = vrsqrt.pop %v1191
    %v1194 = vmul.f32 %v1178, %v1192
    %v1195 = vmul.f32 %v1179, %v1193
    %v1197 = vlaneseq
    %v1198 = vshrl.u32 %v1197, 7
    %v1199 = vsub.s32 0, %v1198
    %v1200 = vrot.slane %v1167, %v1199
    %v1202 = vmul.f32 %v1194, %v1200
    %v1203 = vmul.f32 %v1195, %v1200
    %v1205 = vlaneseq
    %v1206 = vshrl.u32 %v1205, 7
    %v1207 = vsub.s32 0, %v1206
    %v1208 = vrot.slane %v1169, %v1207
    %v1210 = vadd.f32 %v1202, %v1208
    %v1211 = vadd.f32 %v1203, %v1208
    %v1212 = vpack.c.bf16 %v1211, %v1210
    %s1213 = scalar_lea.vmem %s10, 16
    %v1214 = vld [vmem:[%s1213] sm:$0xf]
    %v1215 = vld [vmem:[%s1213 + $0x4] sm:$0xf]
    %v1216 = vld [vmem:[%s1213 + $0x8] sm:$0xf]
    %v1217 = vld [vmem:[%s1213 + $0xc] sm:$0xf]
    %s1218 = scalar_lea.vmem %s11, 1
    %v1219 = vld [vmem:[%s1218] sm:$0x1]
    %v1221 = vlaneseq
    %v1222 = vshrl.u32 %v1221, 7
    %v1223 = vsub.s32 0, %v1222
    %v1224 = vrot.slane %v1219, %v1223
    %v1230 = vunpack.c.l.b16 %v1214
    %v1231 = vunpack.c.l.b16 %v1215
    %v1232 = vunpack.c.l.b16 %v1216
    %v1233 = vunpack.c.l.b16 %v1217
    %v1234 = vpack.c.b16 %v1231, %v1230
    %v1235 = vpack.c.b16 %v1233, %v1232
    %v1239 = vsel %vm66, %v1212, 0
    %1241 = vmatprep.subr.bf16.mxu0 0
    %1242 = vmatpush1.bf16.msra.mxu0 %v1234
    %1243 = vmatprep.subr.bf16.mxu0 0
    %1244 = vmatpush1.bf16.msra.mxu0 %v1235
    %1245 = vmatprep.subr.bf16.mxu0 0
    %1246 = vmatpush1.bf16.msra.mxu0 0
    %1247 = vmatprep.subr.bf16.mxu0 0
    %1248 = vmatpush1.bf16.msra.mxu0 0
    %1249 = vmatprep.subr.bf16.mxu0 0
    %1250 = vmatpush1.bf16.msra.mxu0 0
    %1251 = vmatprep.subr.bf16.mxu0 0
    %1252 = vmatpush1.bf16.msra.mxu0 0
    %1253 = vmatprep.subr.bf16.mxu0 0
    %1254 = vmatpush1.bf16.msra.mxu0 0
    %1255 = vmatprep.subr.bf16.mxu0 0
    %1256 = vmatpush1.bf16.msra.mxu0 0
    %1257 = vmatprep.subr.bf16.mxu0 0
    %1258 = vmatpush1.bf16.msra.mxu0 0
    %1259 = vmatprep.subr.bf16.mxu0 0
    %1260 = vmatpush1.bf16.msra.mxu0 0
    %1261 = vmatprep.subr.bf16.mxu0 0
    %1262 = vmatpush1.bf16.msra.mxu0 0
    %1263 = vmatprep.subr.bf16.mxu0 0
    %1264 = vmatpush1.bf16.msra.mxu0 0
    %1265 = vmatprep.subr.bf16.mxu0 0
    %1266 = vmatpush1.bf16.msra.mxu0 0
    %1267 = vmatprep.subr.bf16.mxu0 0
    %1268 = vmatpush1.bf16.msra.mxu0 0
    %1269 = vmatprep.subr.bf16.mxu0 0
    %1270 = vmatpush1.bf16.msra.mxu0 0
    %1271 = vmatprep.subr.bf16.mxu0 0
    %1272 = vmatpush1.bf16.msra.mxu0 0
    %1273 = vmatprep.mubr.bf16.mxu0 0
    %1274 = vmatmul.mubr.bf16.gmra.mrb[0].mxu0 %v1239
    %v1275 = vpop.f32.mrb[0].mxu0
    %v1276 = vadd.f32 %v1224, %v1275
    %v1277 = vpop.f32.mrb[0].mxu0
    %v1278 = vpop.f32.mrb[0].mxu0
    %v1279 = vadd.f32 %v1224, %v1278
    %v1280 = vpop.f32.mrb[0].mxu0
    %1281 = vdwg.mxu0
    %v1282 = vmul.f32 %v1276, 0.5
    %v1283 = vmul.f32 %v1279, 0.5
    %v1284 = vmul.f32 %v1276, 0.044715
    %v1285 = vmul.f32 %v1279, 0.044715
    %v1286 = vmul.f32 %v1284, %v1276
    %v1287 = vmul.f32 %v1285, %v1279
    %v1288 = vmul.f32 %v1286, %v1276
    %v1289 = vmul.f32 %v1287, %v1279
    %v1290 = vadd.f32 %v1276, %v1288
    %v1291 = vadd.f32 %v1279, %v1289
    %v1292 = vmul.f32 %v1290, 0.7978846
    %v1293 = vmul.f32 %v1291, 0.7978846
    %v1294 = vtanh.pop %v1292
    %v1295 = vtanh.pop %v1293
    %v1296 = vadd.f32 %v1294, 1.0
    %v1297 = vadd.f32 %v1295, 1.0
    %v1298 = vmul.f32 %v1282, %v1296
    %v1299 = vmul.f32 %v1283, %v1297
    %v1300 = vpack.c.bf16 %v1299, %v1298
    %s1301 = scalar_lea.vmem %s12, 64
    %v1302 = vld [vmem:[%s1301] sm:$0xf]
    %v1303 = vld [vmem:[%s1301 + $0x4] sm:$0xf]
    %v1304 = vld [vmem:[%s1301 + $0x8] sm:$0xf]
    %v1305 = vld [vmem:[%s1301 + $0xc] sm:$0xf]
    %v1306 = vld [vmem:[%s1301 + $0x10] sm:$0xf]
    %v1307 = vld [vmem:[%s1301 + $0x14] sm:$0xf]
    %v1308 = vld [vmem:[%s1301 + $0x18] sm:$0xf]
    %v1309 = vld [vmem:[%s1301 + $0x1c] sm:$0xf]
    %v1310 = vld [vmem:[%s1301 + $0x20] sm:$0xf]
    %v1311 = vld [vmem:[%s1301 + $0x24] sm:$0xf]
    %v1312 = vld [vmem:[%s1301 + $0x28] sm:$0xf]
    %v1313 = vld [vmem:[%s1301 + $0x2c] sm:$0xf]
    %v1314 = vld [vmem:[%s1301 + $0x30] sm:$0xf]
    %v1315 = vld [vmem:[%s1301 + $0x34] sm:$0xf]
    %v1316 = vld [vmem:[%s1301 + $0x38] sm:$0xf]
    %v1317 = vld [vmem:[%s1301 + $0x3c] sm:$0xf]
    %s1318 = scalar_lea.vmem %s13, 1
    %v1319 = vld [vmem:[%s1318] sm:$0x1]
    %v1321 = vlaneseq
    %v1322 = vshrl.u32 %v1321, 7
    %v1323 = vsub.s32 0, %v1322
    %v1324 = vrot.slane %v1319, %v1323
    %v1342 = vunpack.c.l.b16 %v1302
    %v1343 = vunpack.c.l.b16 %v1303
    %v1344 = vunpack.c.l.b16 %v1304
    %v1345 = vunpack.c.l.b16 %v1305
    %v1346 = vunpack.c.l.b16 %v1306
    %v1347 = vunpack.c.l.b16 %v1307
    %v1348 = vunpack.c.l.b16 %v1308
    %v1349 = vunpack.c.l.b16 %v1309
    %v1350 = vunpack.c.l.b16 %v1310
    %v1351 = vunpack.c.l.b16 %v1311
    %v1352 = vunpack.c.l.b16 %v1312
    %v1353 = vunpack.c.l.b16 %v1313
    %v1354 = vunpack.c.l.b16 %v1314
    %v1355 = vunpack.c.l.b16 %v1315
    %v1356 = vunpack.c.l.b16 %v1316
    %v1357 = vunpack.c.l.b16 %v1317
    %v1358 = vpack.c.b16 %v1343, %v1342
    %v1359 = vpack.c.b16 %v1345, %v1344
    %v1360 = vpack.c.b16 %v1347, %v1346
    %v1361 = vpack.c.b16 %v1349, %v1348
    %v1362 = vpack.c.b16 %v1351, %v1350
    %v1363 = vpack.c.b16 %v1353, %v1352
    %v1364 = vpack.c.b16 %v1355, %v1354
    %v1365 = vpack.c.b16 %v1357, %v1356
    %1374 = vmatprep.subr.bf16.mxu0 0
    %1375 = vmatpush1.bf16.msra.mxu0 %v1358
    %1376 = vmatprep.subr.bf16.mxu0 0
    %1377 = vmatpush1.bf16.msra.mxu0 %v1359
    %1378 = vmatprep.subr.bf16.mxu0 0
    %1379 = vmatpush1.bf16.msra.mxu0 %v1360
    %1380 = vmatprep.subr.bf16.mxu0 0
    %1381 = vmatpush1.bf16.msra.mxu0 %v1361
    %1382 = vmatprep.subr.bf16.mxu0 0
    %1383 = vmatpush1.bf16.msra.mxu0 %v1362
    %1384 = vmatprep.subr.bf16.mxu0 0
    %1385 = vmatpush1.bf16.msra.mxu0 %v1363
    %1386 = vmatprep.subr.bf16.mxu0 0
    %1387 = vmatpush1.bf16.msra.mxu0 %v1364
    %1388 = vmatprep.subr.bf16.mxu0 0
    %1389 = vmatpush1.bf16.msra.mxu0 %v1365
    %1390 = vmatprep.subr.bf16.mxu0 0
    %1391 = vmatpush1.bf16.msra.mxu0 0
    %1392 = vmatprep.subr.bf16.mxu0 0
    %1393 = vmatpush1.bf16.msra.mxu0 0
    %1394 = vmatprep.subr.bf16.mxu0 0
    %1395 = vmatpush1.bf16.msra.mxu0 0
    %1396 = vmatprep.subr.bf16.mxu0 0
    %1397 = vmatpush1.bf16.msra.mxu0 0
    %1398 = vmatprep.subr.bf16.mxu0 0
    %1399 = vmatpush1.bf16.msra.mxu0 0
    %1400 = vmatprep.subr.bf16.mxu0 0
    %1401 = vmatpush1.bf16.msra.mxu0 0
    %1402 = vmatprep.subr.bf16.mxu0 0
    %1403 = vmatpush1.bf16.msra.mxu0 0
    %1404 = vmatprep.subr.bf16.mxu0 0
    %1405 = vmatpush1.bf16.msra.mxu0 0
    %1406 = vmatprep.mubr.bf16.mxu0 0
    %1407 = vmatmul.mubr.bf16.gmra.mrb[0].mxu0 %v1300
    %v1408 = vpop.f32.mrb[0].mxu0
    %v1409 = vadd.f32 %v1324, %v1408
    %v1410 = vpop.f32.mrb[0].mxu0
    %v1411 = vpop.f32.mrb[0].mxu0
    %v1412 = vadd.f32 %v1324, %v1411
    %v1413 = vpop.f32.mrb[0].mxu0
    %1414 = vdwg.mxu0
    %v1415 = vadd.f32 %v1164, %v1409
    %v1416 = vadd.f32 %v1165, %v1412
    %v1417 = vld [vmem:[%s14] sm:$0x1]
    %v1418 = vld [vmem:[%s15] sm:$0x1]
    %v1419 = vsel %vm66, %v1415, 0.0
    %1420 = vadd.xlane.f32.xlu0 %v1419
    %v1421 = vpop.xlane.xlu0 %1420
    %v1422 = vsel %vm66, %v1416, 0.0
    %1423 = vadd.xlane.f32.xlu0 %v1422
    %v1424 = vpop.xlane.xlu0 %1423
    %v1425 = vmul.f32 %v1421, %v73
    %v1426 = vmul.f32 %v1424, %v73
    %v1427 = vsub.f32 %v1415, %v1425
    %v1428 = vsub.f32 %v1416, %v1426
    %v1429 = vmul.f32 %v1427, %v1427
    %v1430 = vmul.f32 %v1428, %v1428
    %v1431 = vsel %vm66, %v1429, 0.0
    %1432 = vadd.xlane.f32.xlu0 %v1431
    %v1433 = vpop.xlane.xlu0 %1432
    %v1434 = vsel %vm66, %v1430, 0.0
    %1435 = vadd.xlane.f32.xlu0 %v1434
    %v1436 = vpop.xlane.xlu0 %1435
    %v1437 = vmul.f32 %v1433, %v73
    %v1438 = vmul.f32 %v1436, %v73
    %v1439 = vadd.f32 %v1437, 1e-05
    %v1440 = vadd.f32 %v1438, 1e-05
    %v1441 = vrsqrt.pop %v1439
    %v1442 = vrsqrt.pop %v1440
    %v1443 = vmul.f32 %v1427, %v1441
    %v1444 = vmul.f32 %v1428, %v1442
    %v1446 = vlaneseq
    %v1447 = vshrl.u32 %v1446, 7
    %v1448 = vsub.s32 0, %v1447
    %v1449 = vrot.slane %v1417, %v1448
    %v1451 = vmul.f32 %v1443, %v1449
    %v1452 = vmul.f32 %v1444, %v1449
    %v1454 = vlaneseq
    %v1455 = vshrl.u32 %v1454, 7
    %v1456 = vsub.s32 0, %v1455
    %v1457 = vrot.slane %v1418, %v1456
    %v1459 = vadd.f32 %v1451, %v1457
    %v1460 = vadd.f32 %v1452, %v1457
    %v1461 = vpack.c.bf16 %v1460, %v1459
    %v1462 = vld [vmem:[%s16] sm:$0xf]
    %v1463 = vld [vmem:[%s16 + $0x4] sm:$0xf]
    %v1464 = vld [vmem:[%s16 + $0x8] sm:$0xf]
    %v1465 = vld [vmem:[%s16 + $0xc] sm:$0xf]
    %v1470 = vunpack.c.l.b16 %v1462
    %v1471 = vunpack.c.l.b16 %v1463
    %v1472 = vunpack.c.l.b16 %v1464
    %v1473 = vunpack.c.l.b16 %v1465
    %v1474 = vpack.c.b16 %v1471, %v1470
    %v1475 = vpack.c.b16 %v1473, %v1472
    %v1479 = vsel %vm66, %v1461, 0
    %1481 = vmatprep.subr.bf16.mxu0 0
    %1482 = vmatpush1.bf16.msra.mxu0 %v1474
    %1483 = vmatprep.subr.bf16.mxu0 0
    %1484 = vmatpush1.bf16.msra.mxu0 %v1475
    %1485 = vmatprep.subr.bf16.mxu0 0
    %1486 = vmatpush1.bf16.msra.mxu0 0
    %1487 = vmatprep.subr.bf16.mxu0 0
    %1488 = vmatpush1.bf16.msra.mxu0 0
    %1489 = vmatprep.subr.bf16.mxu0 0
    %1490 = vmatpush1.bf16.msra.mxu0 0
    %1491 = vmatprep.subr.bf16.mxu0 0
    %1492 = vmatpush1.bf16.msra.mxu0 0
    %1493 = vmatprep.subr.bf16.mxu0 0
    %1494 = vmatpush1.bf16.msra.mxu0 0
    %1495 = vmatprep.subr.bf16.mxu0 0
    %1496 = vmatpush1.bf16.msra.mxu0 0
    %1497 = vmatprep.subr.bf16.mxu0 0
    %1498 = vmatpush1.bf16.msra.mxu0 0
    %1499 = vmatprep.subr.bf16.mxu0 0
    %1500 = vmatpush1.bf16.msra.mxu0 0
    %1501 = vmatprep.subr.bf16.mxu0 0
    %1502 = vmatpush1.bf16.msra.mxu0 0
    %1503 = vmatprep.subr.bf16.mxu0 0
    %1504 = vmatpush1.bf16.msra.mxu0 0
    %1505 = vmatprep.subr.bf16.mxu0 0
    %1506 = vmatpush1.bf16.msra.mxu0 0
    %1507 = vmatprep.subr.bf16.mxu0 0
    %1508 = vmatpush1.bf16.msra.mxu0 0
    %1509 = vmatprep.subr.bf16.mxu0 0
    %1510 = vmatpush1.bf16.msra.mxu0 0
    %1511 = vmatprep.subr.bf16.mxu0 0
    %1512 = vmatpush1.bf16.msra.mxu0 0
    %1513 = vmatprep.mubr.bf16.mxu0 0
    %1514 = vmatmul.mubr.bf16.gmra.mrb[0].mxu0 %v1479
    %v1515 = vpop.f32.mrb[0].mxu0
    %v1516 = vadd.f32 0.0, %v1515
    %v1517 = vpop.f32.mrb[0].mxu0
    %v1518 = vpop.f32.mrb[0].mxu0
    %v1519 = vadd.f32 0.0, %v1518
    %v1520 = vpop.f32.mrb[0].mxu0
    %1521 = vdwg.mxu0
    %1522 = vst [vmem:[#allocation2] sm:$0xff] %v1516
    %1523 = vst [vmem:[#allocation2 + $0x8] sm:$0xff] %v1519
    // Predicated region
    $region70: #{gpt_forward.1} parent=1 // pred_check
      _
    $region71: #{gpt_forward.1} parent=1 // pred_check_branch
      %1525 = sbr.rel (0) target = $region73
    $region72: #{gpt_forward.1} parent=1 // pred_region
      %s1527 = ssub.s32 256, 256
      %1528 = vsyncadd [#allocation3], %s1527
      %s1529 = sshll.u32 [#allocation2], 4
      %s1530 = int_to_ptr.vmem [resolvable:$true] %s1529
      %1535 = dma.vmem_to_hbm [thread:$0]  %s1530, 256, %s17, [#allocation3], 128, 128, 8
    $region73: #{gpt_forward.1} parent=1 // pred_fallthru
      _
    // Predicated region
    $region74: #{gpt_forward.1} parent=1 // pred_check
      _
    $region75: #{gpt_forward.1} parent=1 // pred_check_branch
      %1537 = sbr.rel (0) target = $region77
    $region76: #{gpt_forward.1} parent=1 // pred_region
      %1538 = dma.done [#allocation3], 256
    $region77: #{gpt_forward.1} parent=1 // pred_fallthru
      _
    %1539 = vsyncpa [#allocation3], 1

</llo_original>
